<compile_context>
chip_gen: v5e
topology: v5e:2x2
jax: 0.10.0
libtpu: 0.0.40
codegen_flags: <defaults>
</compile_context>

<pallas_src>
import math
import functools

import jax
import jax.numpy as jnp
from jax.experimental import pallas as pl
from jax.experimental.pallas import tpu as pltpu


# --------------------------------------------------------------------------
# Shared math helpers
# --------------------------------------------------------------------------
def _layer_norm(y, g, b):
    mu = jnp.mean(y, axis=-1, keepdims=True)
    var = jnp.mean((y - mu) ** 2, axis=-1, keepdims=True)
    return (y - mu) * jax.lax.rsqrt(var + 1e-5) * g + b


# --------------------------------------------------------------------------
# Fused decoder-stack kernel: grid = (batch_blocks, layer)
# --------------------------------------------------------------------------
def decoder_stack_kernel(
    x_ref, mask_ref,
    wqkv_ref, wo_ref, w1_ref, b1_ref, w2_ref, vecs_ref,
    o_ref,
    *, num_heads, qkv_dim,
):
    layer = pl.program_id(1)

    # Activations live in the output block, resident in VMEM across the inner
    # ("arbitrary") layer axis.  Initialize from the input once.
    @pl.when(layer == 0)
    def _():
        o_ref[...] = x_ref[...]

    Bblk, T, H = o_ref.shape
    nh, dh = num_heads, qkv_dim
    M = Bblk * T
    bf16 = jnp.bfloat16

    x = o_ref[...].reshape(M, H)                      # (M, H) float32
    vecs = vecs_ref[0]                                # (9, H) f32:
    # rows: 0=bq(scaled) 1=bk 2=bv 3=bo 4=ln1_g 5=ln1_b 6=b2 7=ln2_g 8=ln2_b

    # ---- fused QKV projection: one (M,H)@(H,3H) MXU matmul -----------------
    qkv = jnp.dot(x.astype(bf16), wqkv_ref[0],
                  preferred_element_type=jnp.float32)             # (M, 3H)
    # 1/sqrt(dh) is folded into wq / bq at pack time.
    q = (qkv[:, 0:H] + vecs[0:1]).reshape(Bblk, T, H).astype(bf16)
    k = (qkv[:, H:2 * H] + vecs[1:2]).reshape(Bblk, T, H).astype(bf16)
    v = (qkv[:, 2 * H:3 * H] + vecs[2:3]).reshape(Bblk, T, H).astype(bf16)

    # Additive mask bias, expanded from the compact bf16 mask in-kernel.
    bias = jnp.where(mask_ref[...] != 0, 0.0, -1e30).astype(jnp.float32)  # (Bblk,T,T)

    # ---- per-head attention (heads unrolled; static lane slices) -----------
    # TODO(synk): flash-style KV tiling for long T so the (T,T) scores never
    #             materialize fully (needed on v7x's 64 MiB VMEM at long T).
    ctx_heads = []
    for h in range(nh):
        sl = slice(h * dh, (h + 1) * dh)
        qh, kh, vh = q[:, :, sl], k[:, :, sl], v[:, :, sl]        # (Bblk, T, dh)
        s = jnp.einsum("btd,bsd->bts", qh, kh,
                       preferred_element_type=jnp.float32) + bias  # (Bblk, T, T)
        m = jnp.max(s, axis=-1, keepdims=True)
        p = jnp.exp(s - m)
        denom = jnp.sum(p, axis=-1, keepdims=True)
        attn = p * pl.reciprocal(denom, approx=True)              # softmax(dim=-1)
        ctx_heads.append(
            jnp.einsum("bts,bsd->btd", attn.astype(bf16), vh,
                       preferred_element_type=jnp.float32))        # (Bblk, T, dh)
    ctx = jnp.concatenate(ctx_heads, axis=-1).reshape(M, H)        # (M, H)

    # ---- fused output projection: (M,H)@(H,H) -------------------------------
    attn_out = jnp.dot(ctx.astype(bf16), wo_ref[0],
                       preferred_element_type=jnp.float32) + vecs[3:4]

    # ---- post-norm residual 1 ------------------------------------------------
    x1 = _layer_norm(x + attn_out, vecs[4:5], vecs[5:6])

    # ---- MLP -----------------------------------------------------------------
    h1 = jnp.dot(x1.astype(bf16), w1_ref[0],
                 preferred_element_type=jnp.float32) + b1_ref[0]
    # TODO(synk): PyTorch F.gelu default is exact erf; tanh approximation used
    #             for Mosaic-safe lowering.
    h1 = jax.nn.gelu(h1, approximate=True)
    h2 = jnp.dot(h1.astype(bf16), w2_ref[0],
                 preferred_element_type=jnp.float32) + vecs[6:7]

    # ---- post-norm residual 2 --------------------------------------------------
    x2 = _layer_norm(x1 + h2, vecs[7:8], vecs[8:9])
    o_ref[...] = x2.reshape(Bblk, T, H)


# --------------------------------------------------------------------------
# Wrapper
# --------------------------------------------------------------------------
def decoder_forward(x, mask, packed, num_heads, *, batch_block=None):
    """x: (B, T, H) float32; mask: (B, T, T) (nonzero == attendable)."""
    B, T, H = x.shape
    L = packed["wqkv"].shape[0]
    F = packed["w1"].shape[2]
    dh = H // num_heads

    if batch_block is None:
        # Toy shapes: whole batch per block so each layer's weights stream once.
        # TODO(synk): for large B / v7x, pick a divisor keeping B//batch_block
        #             a multiple of 2 (dual TensorCore sharding of the parallel axis).
        batch_block = B
    assert B % batch_block == 0

    mask_c = (mask != 0).astype(jnp.bfloat16)      # compact mask, expanded in-kernel

    kernel = functools.partial(decoder_stack_kernel,
                               num_heads=num_heads, qkv_dim=dh)

    in_specs = [
        pl.BlockSpec((batch_block, T, H), lambda b, l: (b, 0, 0)),  # x (read @ layer 0)
        pl.BlockSpec((batch_block, T, T), lambda b, l: (b, 0, 0)),  # mask (bf16)
        pl.BlockSpec((1, H, 3 * H), lambda b, l: (l, 0, 0)),        # wqkv
        pl.BlockSpec((1, H, H), lambda b, l: (l, 0, 0)),            # wo
        pl.BlockSpec((1, H, F), lambda b, l: (l, 0, 0)),            # w1
        pl.BlockSpec((1, 1, F), lambda b, l: (l, 0, 0)),            # b1
        pl.BlockSpec((1, F, H), lambda b, l: (l, 0, 0)),            # w2
        pl.BlockSpec((1, 9, H), lambda b, l: (l, 0, 0)),            # packed vectors
    ]

    return pl.pallas_call(
        kernel,
        grid=(B // batch_block, L),
        in_specs=in_specs,
        out_specs=pl.BlockSpec((batch_block, T, H), lambda b, l: (b, 0, 0)),
        out_shape=jax.ShapeDtypeStruct((B, T, H), jnp.float32),
        compiler_params=pltpu.CompilerParams(
            dimension_semantics=("parallel", "arbitrary"),
            vmem_limit_bytes=32 * 1024 * 1024,   # safe on v7x (64 MiB physical VMEM)
        ),
    )(x.astype(jnp.float32), mask_c,
      packed["wqkv"], packed["wo"], packed["w1"], packed["b1"],
      packed["w2"], packed["vecs"])


# --------------------------------------------------------------------------
# Parameter construction / packing
# --------------------------------------------------------------------------
def init_layers(key, num_layers, hidden_dim, ff_dim):
    """Per-layer params in x @ W (+ b) convention (transpose of nn.Linear.weight)."""
    H, F = hidden_dim, ff_dim
    keys = iter(jax.random.split(key, num_layers * 16))

    def nrm(shape, scale=0.02):
        return jax.random.normal(next(keys), shape, jnp.float32) * scale

    layers = []
    for _ in range(num_layers):
        layers.append({
            "wq": nrm((H, H)), "bq": nrm((H,)),
            "wk": nrm((H, H)), "bk": nrm((H,)),
            "wv": nrm((H, H)), "bv": nrm((H,)),
            "wo": nrm((H, H)), "bo": nrm((H,)),
            "ln1_g": 1.0 + nrm((H,)), "ln1_b": nrm((H,)),
            "w1": nrm((H, F)), "b1": nrm((F,)),
            "w2": nrm((F, H)), "b2": nrm((H,)),
            "ln2_g": 1.0 + nrm((H,)), "ln2_b": nrm((H,)),
        })
    return layers


def pack_params(layers, num_heads):
    """Fuse QKV weights, fold the attention scale, stack per-layer params into
    (L, ...) arrays, and consolidate the H-sized vectors into one (L,9,H) slab."""
    L = len(layers)
    H = layers[0]["wq"].shape[0]
    F = layers[0]["w1"].shape[1]
    dh = H // num_heads
    scale = 1.0 / math.sqrt(float(dh))
    bf16 = jnp.bfloat16

    def stack(name):
        return jnp.stack([lp[name] for lp in layers])

    wq = stack("wq") * scale                     # fold 1/sqrt(dh) into q weights
    bq = stack("bq") * scale
    wqkv = jnp.concatenate([wq, stack("wk"), stack("wv")], axis=-1).astype(bf16)

    vecs = jnp.stack(
        [bq, stack("bk"), stack("bv"), stack("bo"),
         stack("ln1_g"), stack("ln1_b"), stack("b2"),
         stack("ln2_g"), stack("ln2_b")],
        axis=1).astype(jnp.float32)              # (L, 9, H)

    return {
        "wqkv": wqkv,                            # (L, H, 3H) bf16
        "wo": stack("wo").astype(bf16),          # (L, H, H)  bf16
        "w1": stack("w1").astype(bf16),          # (L, H, F)  bf16
        "b1": stack("b1").reshape(L, 1, F).astype(jnp.float32),
        "w2": stack("w2").astype(bf16),          # (L, F, H)  bf16
        "vecs": vecs,                            # (L, 9, H)  f32
    }


# --------------------------------------------------------------------------
# Pure-JAX reference (f32) for a numerical sanity check
# --------------------------------------------------------------------------
def reference_decoder(x, mask, layers, num_heads):
    B, T, H = x.shape
    dh = H // num_heads
    bias = jnp.where(mask != 0, 0.0, -1e30).astype(jnp.float32)[:, None]  # (B,1,T,T)

    def split(z):
        return z.reshape(B, T, num_heads, dh).transpose(0, 2, 1, 3)

    for lp in layers:
        q = split(x @ lp["wq"] + lp["bq"])
        k = split(x @ lp["wk"] + lp["bk"])
        v = split(x @ lp["wv"] + lp["bv"])
        s = jnp.einsum("bhtd,bhsd->bhts", q, k) / math.sqrt(float(dh)) + bias
        p = jax.nn.softmax(s, axis=-1)
        ctx = jnp.einsum("bhts,bhsd->bhtd", p, v)
        ctx = ctx.transpose(0, 2, 1, 3).reshape(B, T, H)
        a = ctx @ lp["wo"] + lp["bo"]
        x = _layer_norm(x + a, lp["ln1_g"], lp["ln1_b"])
        h1 = jax.nn.gelu(x @ lp["w1"] + lp["b1"], approximate=True)
        h2 = h1 @ lp["w2"] + lp["b2"]
        x = _layer_norm(x + h2, lp["ln2_g"], lp["ln2_b"])
    return x


# --------------------------------------------------------------------------
if __name__ == "__main__":
    num_layers = 2
    hidden_dim = 32
    num_heads = 4
    ff_dim = 64
    B, T = 2, 8

    key = jax.random.PRNGKey(0)
    kparam, kx = jax.random.split(key)

    layers = init_layers(kparam, num_layers, hidden_dim, ff_dim)
    packed = pack_params(layers, num_heads)

    x = jax.random.normal(kx, (B, T, hidden_dim), jnp.float32)
    mask = jnp.broadcast_to(jnp.tril(jnp.ones((T, T), jnp.int32)), (B, T, T))

    out = decoder_forward(x, mask, packed, num_heads)
    jax.block_until_ready(out)
    assert out.shape == (B, T, hidden_dim), out.shape

    ref = reference_decoder(x, mask, layers, num_heads)
    err = float(jnp.max(jnp.abs(out - ref)))
    assert err < 0.1, f"max abs err vs f32 reference: {err}"

    print("KERNEL_OK")
</pallas_src>

<mosaic_0001>
module attributes {stable_mosaic.version = 11 : i64} {
  func.func @decoder_stack_kernel(%arg0: i32, %arg1: i32, %arg2: memref<2x8x32xf32, #tpu.memory_space<vmem>>, %arg3: memref<2x8x8xbf16, #tpu.memory_space<vmem>>, %arg4: memref<1x32x96xbf16, #tpu.memory_space<vmem>>, %arg5: memref<1x32x32xbf16, #tpu.memory_space<vmem>>, %arg6: memref<1x32x64xbf16, #tpu.memory_space<vmem>>, %arg7: memref<1x1x64xf32, #tpu.memory_space<vmem>>, %arg8: memref<1x64x32xbf16, #tpu.memory_space<vmem>>, %arg9: memref<1x9x32xf32, #tpu.memory_space<vmem>>, %arg10: memref<2x8x32xf32, #tpu.memory_space<vmem>>) attributes {dimension_semantics = [#tpu.dimension_semantics<parallel>, #tpu.dimension_semantics<arbitrary>], iteration_bounds = array<i64: 1, 2>, scalar_prefetch = 0 : i64, scratch_operands = 0 : i64, tpu.core_type = #tpu.core_type<tc>, window_params = [{transform_indices = @transform_0, window_bounds = array<i64: 2, 8, 32>}, {transform_indices = @transform_1, window_bounds = array<i64: 2, 8, 8>}, {transform_indices = @transform_2, window_bounds = array<i64: 1, 32, 96>}, {transform_indices = @transform_3, window_bounds = array<i64: 1, 32, 32>}, {transform_indices = @transform_4, window_bounds = array<i64: 1, 32, 64>}, {transform_indices = @transform_5, window_bounds = array<i64: 1, 1, 64>}, {transform_indices = @transform_6, window_bounds = array<i64: 1, 64, 32>}, {transform_indices = @transform_7, window_bounds = array<i64: 1, 9, 32>}, {transform_indices = @transform_8, window_bounds = array<i64: 2, 8, 32>}]} {
    %c0_i32 = arith.constant 0 : i32
    %0 = arith.cmpi eq, %arg1, %c0_i32 : i32
    %1 = arith.extui %0 : i1 to i32
    %c0_i32_0 = arith.constant 0 : i32
    %2 = arith.cmpi ne, %1, %c0_i32_0 : i32
    scf.if %2 {
      %c0_63 = arith.constant 0 : index
      %c0_64 = arith.constant 0 : index
      %c0_65 = arith.constant 0 : index
      %192 = vector.load %arg2[%c0_63, %c0_64, %c0_65] : memref<2x8x32xf32, #tpu.memory_space<vmem>>, vector<2x8x32xf32>
      %c0_66 = arith.constant 0 : index
      %c0_67 = arith.constant 0 : index
      %c0_68 = arith.constant 0 : index
      %193 = vector.load %arg10[%c0_66, %c0_67, %c0_68] : memref<2x8x32xf32, #tpu.memory_space<vmem>>, vector<2x8x32xf32>
      tpu.vector_store %arg10[%c0_66, %c0_67, %c0_68], %192 {strides = array<i32>} : memref<2x8x32xf32, #tpu.memory_space<vmem>>, vector<2x8x32xf32>,
    } else {
    }
    %c0 = arith.constant 0 : index
    %c0_1 = arith.constant 0 : index
    %c0_2 = arith.constant 0 : index
    %3 = vector.load %arg10[%c0, %c0_1, %c0_2] : memref<2x8x32xf32, #tpu.memory_space<vmem>>, vector<2x8x32xf32>
    %4 = vector.shape_cast %3 : vector<2x8x32xf32> to vector<16x32xf32>
    %c0_3 = arith.constant 0 : index
    %c0_4 = arith.constant 0 : index
    %c0_5 = arith.constant 0 : index
    %5 = vector.load %arg9[%c0_3, %c0_4, %c0_5] : memref<1x9x32xf32, #tpu.memory_space<vmem>>, vector<1x9x32xf32>
    %6 = vector.shape_cast %5 : vector<1x9x32xf32> to vector<9x32xf32>
    %7 = arith.truncf %4 : vector<16x32xf32> to vector<16x32xbf16>
    %c0_6 = arith.constant 0 : index
    %c0_7 = arith.constant 0 : index
    %c0_8 = arith.constant 0 : index
    %8 = vector.load %arg4[%c0_6, %c0_7, %c0_8] : memref<1x32x96xbf16, #tpu.memory_space<vmem>>, vector<1x32x96xbf16>
    %9 = vector.shape_cast %8 : vector<1x32x96xbf16> to vector<32x96xbf16>
    %cst = arith.constant dense<0.000000e+00> : vector<16x96xf32>
    %10 = tpu.matmul %7, %9, %cst {dimension_numbers = #tpu.dot_dimension_numbers<[1], [0], [0], [1], [0, 0, 1, 1], [], []>} : vector<16x32xbf16>, vector<32x96xbf16>, vector<16x96xf32> -> vector<16x96xf32>
    %11 = vector.extract_strided_slice %10 {offsets = [0, 0], sizes = [16, 32], strides = [1, 1]} : vector<16x96xf32> to vector<16x32xf32>
    %12 = vector.extract_strided_slice %6 {offsets = [0, 0], sizes = [1, 32], strides = [1, 1]} : vector<9x32xf32> to vector<1x32xf32>
    %13 = vector.broadcast %12 : vector<1x32xf32> to vector<16x32xf32>
    %14 = arith.addf %11, %13 : vector<16x32xf32>
    %15 = vector.shape_cast %14 : vector<16x32xf32> to vector<2x8x32xf32>
    %16 = arith.truncf %15 : vector<2x8x32xf32> to vector<2x8x32xbf16>
    %17 = vector.extract_strided_slice %10 {offsets = [0, 32], sizes = [16, 32], strides = [1, 1]} : vector<16x96xf32> to vector<16x32xf32>
    %18 = vector.extract_strided_slice %6 {offsets = [1, 0], sizes = [1, 32], strides = [1, 1]} : vector<9x32xf32> to vector<1x32xf32>
    %19 = vector.broadcast %18 : vector<1x32xf32> to vector<16x32xf32>
    %20 = arith.addf %17, %19 : vector<16x32xf32>
    %21 = vector.shape_cast %20 : vector<16x32xf32> to vector<2x8x32xf32>
    %22 = arith.truncf %21 : vector<2x8x32xf32> to vector<2x8x32xbf16>
    %23 = vector.extract_strided_slice %10 {offsets = [0, 64], sizes = [16, 32], strides = [1, 1]} : vector<16x96xf32> to vector<16x32xf32>
    %24 = vector.extract_strided_slice %6 {offsets = [2, 0], sizes = [1, 32], strides = [1, 1]} : vector<9x32xf32> to vector<1x32xf32>
    %25 = vector.broadcast %24 : vector<1x32xf32> to vector<16x32xf32>
    %26 = arith.addf %23, %25 : vector<16x32xf32>
    %27 = vector.shape_cast %26 : vector<16x32xf32> to vector<2x8x32xf32>
    %28 = arith.truncf %27 : vector<2x8x32xf32> to vector<2x8x32xbf16>
    %c0_9 = arith.constant 0 : index
    %c0_10 = arith.constant 0 : index
    %c0_11 = arith.constant 0 : index
    %29 = vector.load %arg3[%c0_9, %c0_10, %c0_11] : memref<2x8x8xbf16, #tpu.memory_space<vmem>>, vector<2x8x8xbf16>
    %cst_12 = arith.constant 0.000000e+00 : bf16
    %30 = vector.broadcast %cst_12 : bf16 to vector<2x8x8xbf16>
    %31 = arith.cmpf one, %29, %30 : vector<2x8x8xbf16>
    %cst_13 = arith.constant 0.000000e+00 : f32
    %cst_14 = arith.constant -1.000000e+30 : f32
    %32 = vector.broadcast %cst_13 : f32 to vector<2x8x8xf32>
    %33 = vector.broadcast %cst_14 : f32 to vector<2x8x8xf32>
    %34 = arith.select %31, %32, %33 : vector<2x8x8xi1>, vector<2x8x8xf32>
    %35 = vector.extract_strided_slice %16 {offsets = [0, 0, 0], sizes = [2, 8, 8], strides = [1, 1, 1]} : vector<2x8x32xbf16> to vector<2x8x8xbf16>
    %36 = vector.extract_strided_slice %22 {offsets = [0, 0, 0], sizes = [2, 8, 8], strides = [1, 1, 1]} : vector<2x8x32xbf16> to vector<2x8x8xbf16>
    %37 = vector.extract_strided_slice %28 {offsets = [0, 0, 0], sizes = [2, 8, 8], strides = [1, 1, 1]} : vector<2x8x32xbf16> to vector<2x8x8xbf16>
    "tpu.trace_start"() <{level = 10 : i32, message = "btd,bsd->bts"}> : () -> ()
    %cst_15 = arith.constant dense<0.000000e+00> : vector<2x8x8xf32>
    %38 = tpu.matmul %35, %36, %cst_15 {dimension_numbers = #tpu.dot_dimension_numbers<[2], [2], [1], [1], [0, 0, 0, 1, 1, 1], [0], [0]>} : vector<2x8x8xbf16>, vector<2x8x8xbf16>, vector<2x8x8xf32> -> vector<2x8x8xf32>
    "tpu.trace_stop"() : () -> ()
    %39 = arith.addf %38, %34 : vector<2x8x8xf32>
    %cst_16 = arith.constant dense<0xFF800000> : vector<2x8xf32>
    %40 = vector.multi_reduction <maximumf>, %39, %cst_16 [2] : vector<2x8x8xf32> to vector<2x8xf32>
    %41 = vector.shape_cast %40 : vector<2x8xf32> to vector<2x8x1xf32>
    %42 = vector.broadcast %41 : vector<2x8x1xf32> to vector<2x8x8xf32>
    %43 = arith.subf %39, %42 : vector<2x8x8xf32>
    %44 = math.exp %43 : vector<2x8x8xf32>
    %cst_17 = arith.constant dense<0.000000e+00> : vector<2x8xf32>
    %45 = vector.multi_reduction <add>, %44, %cst_17 [2] : vector<2x8x8xf32> to vector<2x8xf32>
    %46 = vector.shape_cast %45 : vector<2x8xf32> to vector<2x8x1xf32>
    %47 = tpu.reciprocal %46 {approx = true} : vector<2x8x1xf32> -> vector<2x8x1xf32>
    %48 = vector.broadcast %47 : vector<2x8x1xf32> to vector<2x8x8xf32>
    %49 = arith.mulf %44, %48 : vector<2x8x8xf32>
    %50 = arith.truncf %49 : vector<2x8x8xf32> to vector<2x8x8xbf16>
    "tpu.trace_start"() <{level = 10 : i32, message = "bts,bsd->btd"}> : () -> ()
    %cst_18 = arith.constant dense<0.000000e+00> : vector<2x8x8xf32>
    %51 = tpu.matmul %50, %37, %cst_18 {dimension_numbers = #tpu.dot_dimension_numbers<[2], [1], [1], [2], [0, 0, 0, 1, 1, 2], [0], [0]>} : vector<2x8x8xbf16>, vector<2x8x8xbf16>, vector<2x8x8xf32> -> vector<2x8x8xf32>
    "tpu.trace_stop"() : () -> ()
    %52 = vector.extract_strided_slice %16 {offsets = [0, 0, 8], sizes = [2, 8, 8], strides = [1, 1, 1]} : vector<2x8x32xbf16> to vector<2x8x8xbf16>
    %53 = vector.extract_strided_slice %22 {offsets = [0, 0, 8], sizes = [2, 8, 8], strides = [1, 1, 1]} : vector<2x8x32xbf16> to vector<2x8x8xbf16>
    %54 = vector.extract_strided_slice %28 {offsets = [0, 0, 8], sizes = [2, 8, 8], strides = [1, 1, 1]} : vector<2x8x32xbf16> to vector<2x8x8xbf16>
    "tpu.trace_start"() <{level = 10 : i32, message = "btd,bsd->bts"}> : () -> ()
    %cst_19 = arith.constant dense<0.000000e+00> : vector<2x8x8xf32>
    %55 = tpu.matmul %52, %53, %cst_19 {dimension_numbers = #tpu.dot_dimension_numbers<[2], [2], [1], [1], [0, 0, 0, 1, 1, 1], [0], [0]>} : vector<2x8x8xbf16>, vector<2x8x8xbf16>, vector<2x8x8xf32> -> vector<2x8x8xf32>
    "tpu.trace_stop"() : () -> ()
    %56 = arith.addf %55, %34 : vector<2x8x8xf32>
    %cst_20 = arith.constant dense<0xFF800000> : vector<2x8xf32>
    %57 = vector.multi_reduction <maximumf>, %56, %cst_20 [2] : vector<2x8x8xf32> to vector<2x8xf32>
    %58 = vector.shape_cast %57 : vector<2x8xf32> to vector<2x8x1xf32>
    %59 = vector.broadcast %58 : vector<2x8x1xf32> to vector<2x8x8xf32>
    %60 = arith.subf %56, %59 : vector<2x8x8xf32>
    %61 = math.exp %60 : vector<2x8x8xf32>
    %cst_21 = arith.constant dense<0.000000e+00> : vector<2x8xf32>
    %62 = vector.multi_reduction <add>, %61, %cst_21 [2] : vector<2x8x8xf32> to vector<2x8xf32>
    %63 = vector.shape_cast %62 : vector<2x8xf32> to vector<2x8x1xf32>
    %64 = tpu.reciprocal %63 {approx = true} : vector<2x8x1xf32> -> vector<2x8x1xf32>
    %65 = vector.broadcast %64 : vector<2x8x1xf32> to vector<2x8x8xf32>
    %66 = arith.mulf %61, %65 : vector<2x8x8xf32>
    %67 = arith.truncf %66 : vector<2x8x8xf32> to vector<2x8x8xbf16>
    "tpu.trace_start"() <{level = 10 : i32, message = "bts,bsd->btd"}> : () -> ()
    %cst_22 = arith.constant dense<0.000000e+00> : vector<2x8x8xf32>
    %68 = tpu.matmul %67, %54, %cst_22 {dimension_numbers = #tpu.dot_dimension_numbers<[2], [1], [1], [2], [0, 0, 0, 1, 1, 2], [0], [0]>} : vector<2x8x8xbf16>, vector<2x8x8xbf16>, vector<2x8x8xf32> -> vector<2x8x8xf32>
    "tpu.trace_stop"() : () -> ()
    %69 = vector.extract_strided_slice %16 {offsets = [0, 0, 16], sizes = [2, 8, 8], strides = [1, 1, 1]} : vector<2x8x32xbf16> to vector<2x8x8xbf16>
    %70 = vector.extract_strided_slice %22 {offsets = [0, 0, 16], sizes = [2, 8, 8], strides = [1, 1, 1]} : vector<2x8x32xbf16> to vector<2x8x8xbf16>
    %71 = vector.extract_strided_slice %28 {offsets = [0, 0, 16], sizes = [2, 8, 8], strides = [1, 1, 1]} : vector<2x8x32xbf16> to vector<2x8x8xbf16>
    "tpu.trace_start"() <{level = 10 : i32, message = "btd,bsd->bts"}> : () -> ()
    %cst_23 = arith.constant dense<0.000000e+00> : vector<2x8x8xf32>
    %72 = tpu.matmul %69, %70, %cst_23 {dimension_numbers = #tpu.dot_dimension_numbers<[2], [2], [1], [1], [0, 0, 0, 1, 1, 1], [0], [0]>} : vector<2x8x8xbf16>, vector<2x8x8xbf16>, vector<2x8x8xf32> -> vector<2x8x8xf32>
    "tpu.trace_stop"() : () -> ()
    %73 = arith.addf %72, %34 : vector<2x8x8xf32>
    %cst_24 = arith.constant dense<0xFF800000> : vector<2x8xf32>
    %74 = vector.multi_reduction <maximumf>, %73, %cst_24 [2] : vector<2x8x8xf32> to vector<2x8xf32>
    %75 = vector.shape_cast %74 : vector<2x8xf32> to vector<2x8x1xf32>
    %76 = vector.broadcast %75 : vector<2x8x1xf32> to vector<2x8x8xf32>
    %77 = arith.subf %73, %76 : vector<2x8x8xf32>
    %78 = math.exp %77 : vector<2x8x8xf32>
    %cst_25 = arith.constant dense<0.000000e+00> : vector<2x8xf32>
    %79 = vector.multi_reduction <add>, %78, %cst_25 [2] : vector<2x8x8xf32> to vector<2x8xf32>
    %80 = vector.shape_cast %79 : vector<2x8xf32> to vector<2x8x1xf32>
    %81 = tpu.reciprocal %80 {approx = true} : vector<2x8x1xf32> -> vector<2x8x1xf32>
    %82 = vector.broadcast %81 : vector<2x8x1xf32> to vector<2x8x8xf32>
    %83 = arith.mulf %78, %82 : vector<2x8x8xf32>
    %84 = arith.truncf %83 : vector<2x8x8xf32> to vector<2x8x8xbf16>
    "tpu.trace_start"() <{level = 10 : i32, message = "bts,bsd->btd"}> : () -> ()
    %cst_26 = arith.constant dense<0.000000e+00> : vector<2x8x8xf32>
    %85 = tpu.matmul %84, %71, %cst_26 {dimension_numbers = #tpu.dot_dimension_numbers<[2], [1], [1], [2], [0, 0, 0, 1, 1, 2], [0], [0]>} : vector<2x8x8xbf16>, vector<2x8x8xbf16>, vector<2x8x8xf32> -> vector<2x8x8xf32>
    "tpu.trace_stop"() : () -> ()
    %86 = vector.extract_strided_slice %16 {offsets = [0, 0, 24], sizes = [2, 8, 8], strides = [1, 1, 1]} : vector<2x8x32xbf16> to vector<2x8x8xbf16>
    %87 = vector.extract_strided_slice %22 {offsets = [0, 0, 24], sizes = [2, 8, 8], strides = [1, 1, 1]} : vector<2x8x32xbf16> to vector<2x8x8xbf16>
    %88 = vector.extract_strided_slice %28 {offsets = [0, 0, 24], sizes = [2, 8, 8], strides = [1, 1, 1]} : vector<2x8x32xbf16> to vector<2x8x8xbf16>
    "tpu.trace_start"() <{level = 10 : i32, message = "btd,bsd->bts"}> : () -> ()
    %cst_27 = arith.constant dense<0.000000e+00> : vector<2x8x8xf32>
    %89 = tpu.matmul %86, %87, %cst_27 {dimension_numbers = #tpu.dot_dimension_numbers<[2], [2], [1], [1], [0, 0, 0, 1, 1, 1], [0], [0]>} : vector<2x8x8xbf16>, vector<2x8x8xbf16>, vector<2x8x8xf32> -> vector<2x8x8xf32>
    "tpu.trace_stop"() : () -> ()
    %90 = arith.addf %89, %34 : vector<2x8x8xf32>
    %cst_28 = arith.constant dense<0xFF800000> : vector<2x8xf32>
    %91 = vector.multi_reduction <maximumf>, %90, %cst_28 [2] : vector<2x8x8xf32> to vector<2x8xf32>
    %92 = vector.shape_cast %91 : vector<2x8xf32> to vector<2x8x1xf32>
    %93 = vector.broadcast %92 : vector<2x8x1xf32> to vector<2x8x8xf32>
    %94 = arith.subf %90, %93 : vector<2x8x8xf32>
    %95 = math.exp %94 : vector<2x8x8xf32>
    %cst_29 = arith.constant dense<0.000000e+00> : vector<2x8xf32>
    %96 = vector.multi_reduction <add>, %95, %cst_29 [2] : vector<2x8x8xf32> to vector<2x8xf32>
    %97 = vector.shape_cast %96 : vector<2x8xf32> to vector<2x8x1xf32>
    %98 = tpu.reciprocal %97 {approx = true} : vector<2x8x1xf32> -> vector<2x8x1xf32>
    %99 = vector.broadcast %98 : vector<2x8x1xf32> to vector<2x8x8xf32>
    %100 = arith.mulf %95, %99 : vector<2x8x8xf32>
    %101 = arith.truncf %100 : vector<2x8x8xf32> to vector<2x8x8xbf16>
    "tpu.trace_start"() <{level = 10 : i32, message = "bts,bsd->btd"}> : () -> ()
    %cst_30 = arith.constant dense<0.000000e+00> : vector<2x8x8xf32>
    %102 = tpu.matmul %101, %88, %cst_30 {dimension_numbers = #tpu.dot_dimension_numbers<[2], [1], [1], [2], [0, 0, 0, 1, 1, 2], [0], [0]>} : vector<2x8x8xbf16>, vector<2x8x8xbf16>, vector<2x8x8xf32> -> vector<2x8x8xf32>
    "tpu.trace_stop"() : () -> ()
    %103 = tpu.concatenate %51, %68, %85, %102 in 2 : vector<2x8x8xf32>, vector<2x8x8xf32>, vector<2x8x8xf32>, vector<2x8x8xf32> -> vector<2x8x32xf32>
    %104 = vector.shape_cast %103 : vector<2x8x32xf32> to vector<16x32xf32>
    %105 = arith.truncf %104 : vector<16x32xf32> to vector<16x32xbf16>
    %c0_31 = arith.constant 0 : index
    %c0_32 = arith.constant 0 : index
    %c0_33 = arith.constant 0 : index
    %106 = vector.load %arg5[%c0_31, %c0_32, %c0_33] : memref<1x32x32xbf16, #tpu.memory_space<vmem>>, vector<1x32x32xbf16>
    %107 = vector.shape_cast %106 : vector<1x32x32xbf16> to vector<32x32xbf16>
    %cst_34 = arith.constant dense<0.000000e+00> : vector<16x32xf32>
    %108 = tpu.matmul %105, %107, %cst_34 {dimension_numbers = #tpu.dot_dimension_numbers<[1], [0], [0], [1], [0, 0, 1, 1], [], []>} : vector<16x32xbf16>, vector<32x32xbf16>, vector<16x32xf32> -> vector<16x32xf32>
    %109 = vector.extract_strided_slice %6 {offsets = [3, 0], sizes = [1, 32], strides = [1, 1]} : vector<9x32xf32> to vector<1x32xf32>
    %110 = vector.broadcast %109 : vector<1x32xf32> to vector<16x32xf32>
    %111 = arith.addf %108, %110 : vector<16x32xf32>
    %112 = arith.addf %4, %111 : vector<16x32xf32>
    %113 = vector.extract_strided_slice %6 {offsets = [4, 0], sizes = [1, 32], strides = [1, 1]} : vector<9x32xf32> to vector<1x32xf32>
    %114 = vector.extract_strided_slice %6 {offsets = [5, 0], sizes = [1, 32], strides = [1, 1]} : vector<9x32xf32> to vector<1x32xf32>
    %cst_35 = arith.constant dense<0.000000e+00> : vector<16xf32>
    %115 = vector.multi_reduction <add>, %112, %cst_35 [1] : vector<16x32xf32> to vector<16xf32>
    %116 = vector.shape_cast %115 : vector<16xf32> to vector<16x1xf32>
    %cst_36 = arith.constant 3.200000e+01 : f32
    %117 = vector.broadcast %cst_36 : f32 to vector<16x1xf32>
    %118 = arith.divf %116, %117 : vector<16x1xf32>
    %119 = vector.broadcast %118 : vector<16x1xf32> to vector<16x32xf32>
    %120 = arith.subf %112, %119 : vector<16x32xf32>
    %121 = arith.mulf %120, %120 : vector<16x32xf32>
    %cst_37 = arith.constant dense<0.000000e+00> : vector<16xf32>
    %122 = vector.multi_reduction <add>, %121, %cst_37 [1] : vector<16x32xf32> to vector<16xf32>
    %123 = vector.shape_cast %122 : vector<16xf32> to vector<16x1xf32>
    %cst_38 = arith.constant 3.200000e+01 : f32
    %124 = vector.broadcast %cst_38 : f32 to vector<16x1xf32>
    %125 = arith.divf %123, %124 : vector<16x1xf32>
    %126 = vector.broadcast %118 : vector<16x1xf32> to vector<16x32xf32>
    %127 = arith.subf %112, %126 : vector<16x32xf32>
    %cst_39 = arith.constant 9.99999974E-6 : f32
    %128 = vector.broadcast %cst_39 : f32 to vector<16x1xf32>
    %129 = arith.addf %125, %128 : vector<16x1xf32>
    %130 = math.rsqrt %129 : vector<16x1xf32>
    %131 = vector.broadcast %130 : vector<16x1xf32> to vector<16x32xf32>
    %132 = arith.mulf %127, %131 : vector<16x32xf32>
    %133 = vector.broadcast %113 : vector<1x32xf32> to vector<16x32xf32>
    %134 = arith.mulf %132, %133 : vector<16x32xf32>
    %135 = vector.broadcast %114 : vector<1x32xf32> to vector<16x32xf32>
    %136 = arith.addf %134, %135 : vector<16x32xf32>
    %137 = arith.truncf %136 : vector<16x32xf32> to vector<16x32xbf16>
    %c0_40 = arith.constant 0 : index
    %c0_41 = arith.constant 0 : index
    %c0_42 = arith.constant 0 : index
    %138 = vector.load %arg6[%c0_40, %c0_41, %c0_42] : memref<1x32x64xbf16, #tpu.memory_space<vmem>>, vector<1x32x64xbf16>
    %139 = vector.shape_cast %138 : vector<1x32x64xbf16> to vector<32x64xbf16>
    %cst_43 = arith.constant dense<0.000000e+00> : vector<16x64xf32>
    %140 = tpu.matmul %137, %139, %cst_43 {dimension_numbers = #tpu.dot_dimension_numbers<[1], [0], [0], [1], [0, 0, 1, 1], [], []>} : vector<16x32xbf16>, vector<32x64xbf16>, vector<16x64xf32> -> vector<16x64xf32>
    %c0_44 = arith.constant 0 : index
    %c0_45 = arith.constant 0 : index
    %c0_46 = arith.constant 0 : index
    %141 = vector.load %arg7[%c0_44, %c0_45, %c0_46] : memref<1x1x64xf32, #tpu.memory_space<vmem>>, vector<1x1x64xf32>
    %142 = vector.shape_cast %141 : vector<1x1x64xf32> to vector<1x64xf32>
    %143 = vector.broadcast %142 : vector<1x64xf32> to vector<16x64xf32>
    %144 = arith.addf %140, %143 : vector<16x64xf32>
    %145 = arith.mulf %144, %144 : vector<16x64xf32>
    %146 = arith.mulf %144, %145 : vector<16x64xf32>
    %cst_47 = arith.constant 4.471500e-02 : f32
    %147 = vector.broadcast %cst_47 : f32 to vector<16x64xf32>
    %148 = arith.mulf %147, %146 : vector<16x64xf32>
    %149 = arith.addf %144, %148 : vector<16x64xf32>
    %cst_48 = arith.constant 0.797884583 : f32
    %150 = vector.broadcast %cst_48 : f32 to vector<16x64xf32>
    %151 = arith.mulf %150, %149 : vector<16x64xf32>
    %152 = math.tanh %151 : vector<16x64xf32>
    %cst_49 = arith.constant 1.000000e+00 : f32
    %153 = vector.broadcast %cst_49 : f32 to vector<16x64xf32>
    %154 = arith.addf %153, %152 : vector<16x64xf32>
    %cst_50 = arith.constant 5.000000e-01 : f32
    %155 = vector.broadcast %cst_50 : f32 to vector<16x64xf32>
    %156 = arith.mulf %155, %154 : vector<16x64xf32>
    %157 = arith.mulf %144, %156 : vector<16x64xf32>
    %158 = arith.truncf %157 : vector<16x64xf32> to vector<16x64xbf16>
    %c0_51 = arith.constant 0 : index
    %c0_52 = arith.constant 0 : index
    %c0_53 = arith.constant 0 : index
    %159 = vector.load %arg8[%c0_51, %c0_52, %c0_53] : memref<1x64x32xbf16, #tpu.memory_space<vmem>>, vector<1x64x32xbf16>
    %160 = vector.shape_cast %159 : vector<1x64x32xbf16> to vector<64x32xbf16>
    %cst_54 = arith.constant dense<0.000000e+00> : vector<16x32xf32>
    %161 = tpu.matmul %158, %160, %cst_54 {dimension_numbers = #tpu.dot_dimension_numbers<[1], [0], [0], [1], [0, 0, 1, 1], [], []>} : vector<16x64xbf16>, vector<64x32xbf16>, vector<16x32xf32> -> vector<16x32xf32>
    %162 = vector.extract_strided_slice %6 {offsets = [6, 0], sizes = [1, 32], strides = [1, 1]} : vector<9x32xf32> to vector<1x32xf32>
    %163 = vector.broadcast %162 : vector<1x32xf32> to vector<16x32xf32>
    %164 = arith.addf %161, %163 : vector<16x32xf32>
    %165 = arith.addf %136, %164 : vector<16x32xf32>
    %166 = vector.extract_strided_slice %6 {offsets = [7, 0], sizes = [1, 32], strides = [1, 1]} : vector<9x32xf32> to vector<1x32xf32>
    %167 = vector.extract_strided_slice %6 {offsets = [8, 0], sizes = [1, 32], strides = [1, 1]} : vector<9x32xf32> to vector<1x32xf32>
    %cst_55 = arith.constant dense<0.000000e+00> : vector<16xf32>
    %168 = vector.multi_reduction <add>, %165, %cst_55 [1] : vector<16x32xf32> to vector<16xf32>
    %169 = vector.shape_cast %168 : vector<16xf32> to vector<16x1xf32>
    %cst_56 = arith.constant 3.200000e+01 : f32
    %170 = vector.broadcast %cst_56 : f32 to vector<16x1xf32>
    %171 = arith.divf %169, %170 : vector<16x1xf32>
    %172 = vector.broadcast %171 : vector<16x1xf32> to vector<16x32xf32>
    %173 = arith.subf %165, %172 : vector<16x32xf32>
    %174 = arith.mulf %173, %173 : vector<16x32xf32>
    %cst_57 = arith.constant dense<0.000000e+00> : vector<16xf32>
    %175 = vector.multi_reduction <add>, %174, %cst_57 [1] : vector<16x32xf32> to vector<16xf32>
    %176 = vector.shape_cast %175 : vector<16xf32> to vector<16x1xf32>
    %cst_58 = arith.constant 3.200000e+01 : f32
    %177 = vector.broadcast %cst_58 : f32 to vector<16x1xf32>
    %178 = arith.divf %176, %177 : vector<16x1xf32>
    %179 = vector.broadcast %171 : vector<16x1xf32> to vector<16x32xf32>
    %180 = arith.subf %165, %179 : vector<16x32xf32>
    %cst_59 = arith.constant 9.99999974E-6 : f32
    %181 = vector.broadcast %cst_59 : f32 to vector<16x1xf32>
    %182 = arith.addf %178, %181 : vector<16x1xf32>
    %183 = math.rsqrt %182 : vector<16x1xf32>
    %184 = vector.broadcast %183 : vector<16x1xf32> to vector<16x32xf32>
    %185 = arith.mulf %180, %184 : vector<16x32xf32>
    %186 = vector.broadcast %166 : vector<1x32xf32> to vector<16x32xf32>
    %187 = arith.mulf %185, %186 : vector<16x32xf32>
    %188 = vector.broadcast %167 : vector<1x32xf32> to vector<16x32xf32>
    %189 = arith.addf %187, %188 : vector<16x32xf32>
    %190 = vector.shape_cast %189 : vector<16x32xf32> to vector<2x8x32xf32>
    %c0_60 = arith.constant 0 : index
    %c0_61 = arith.constant 0 : index
    %c0_62 = arith.constant 0 : index
    %191 = vector.load %arg10[%c0_60, %c0_61, %c0_62] : memref<2x8x32xf32, #tpu.memory_space<vmem>>, vector<2x8x32xf32>
    tpu.vector_store %arg10[%c0_60, %c0_61, %c0_62], %190 {strides = array<i32>} : memref<2x8x32xf32, #tpu.memory_space<vmem>>, vector<2x8x32xf32>,
    return
  }
  func.func @transform_0(%arg0: i32, %arg1: i32) -> (i32, i32, i32) {
    %c0_i32 = arith.constant 0 : i32
    %c0_i32_0 = arith.constant 0 : i32
    %c0_i32_1 = arith.constant 0 : i32
    return %arg0, %c0_i32, %c0_i32_0 : i32, i32, i32
  }
  func.func @transform_1(%arg0: i32, %arg1: i32) -> (i32, i32, i32) {
    %c0_i32 = arith.constant 0 : i32
    %c0_i32_0 = arith.constant 0 : i32
    %c0_i32_1 = arith.constant 0 : i32
    return %arg0, %c0_i32, %c0_i32_0 : i32, i32, i32
  }
  func.func @transform_2(%arg0: i32, %arg1: i32) -> (i32, i32, i32) {
    %c0_i32 = arith.constant 0 : i32
    %c0_i32_0 = arith.constant 0 : i32
    %c0_i32_1 = arith.constant 0 : i32
    return %arg1, %c0_i32, %c0_i32_0 : i32, i32, i32
  }
  func.func @transform_3(%arg0: i32, %arg1: i32) -> (i32, i32, i32) {
    %c0_i32 = arith.constant 0 : i32
    %c0_i32_0 = arith.constant 0 : i32
    %c0_i32_1 = arith.constant 0 : i32
    return %arg1, %c0_i32, %c0_i32_0 : i32, i32, i32
  }
  func.func @transform_4(%arg0: i32, %arg1: i32) -> (i32, i32, i32) {
    %c0_i32 = arith.constant 0 : i32
    %c0_i32_0 = arith.constant 0 : i32
    %c0_i32_1 = arith.constant 0 : i32
    return %arg1, %c0_i32, %c0_i32_0 : i32, i32, i32
  }
  func.func @transform_5(%arg0: i32, %arg1: i32) -> (i32, i32, i32) {
    %c0_i32 = arith.constant 0 : i32
    %c0_i32_0 = arith.constant 0 : i32
    %c0_i32_1 = arith.constant 0 : i32
    return %arg1, %c0_i32, %c0_i32_0 : i32, i32, i32
  }
  func.func @transform_6(%arg0: i32, %arg1: i32) -> (i32, i32, i32) {
    %c0_i32 = arith.constant 0 : i32
    %c0_i32_0 = arith.constant 0 : i32
    %c0_i32_1 = arith.constant 0 : i32
    return %arg1, %c0_i32, %c0_i32_0 : i32, i32, i32
  }
  func.func @transform_7(%arg0: i32, %arg1: i32) -> (i32, i32, i32) {
    %c0_i32 = arith.constant 0 : i32
    %c0_i32_0 = arith.constant 0 : i32
    %c0_i32_1 = arith.constant 0 : i32
    return %arg1, %c0_i32, %c0_i32_0 : i32, i32, i32
  }
  func.func @transform_8(%arg0: i32, %arg1: i32) -> (i32, i32, i32) {
    %c0_i32 = arith.constant 0 : i32
    %c0_i32_0 = arith.constant 0 : i32
    %c0_i32_1 = arith.constant 0 : i32
    return %arg0, %c0_i32, %c0_i32_0 : i32, i32, i32
  }
}

</mosaic_0001>

<llo_original>
// kernel: tpu_custom_call.1
$region0: #{tpu_custom_call.1}
  #allocation0 [shape = 'u32[]', space=smem, size = 0x4, offset = 0x4, fixed_abs, tag = 'smem constant byte address 0x4 - core index']
  #allocation1 [shape = 'u32[72,128]{1,0:T(1,128)}', space=vmem, size = 0x9000, scoped, tag = 'internal scratch']
  %s0 = inlined_call_operand.vmem [shape: f32[2,8,32], index: 0, kind: input, shape index: {}]
  %s1 = inlined_call_operand.hbm [shape: bf16[2,8,8], index: 1, kind: input, shape index: {}]
  %s2 = inlined_call_operand.vmem [shape: bf16[2,32,96], index: 2, kind: input, shape index: {}]
  %s3 = inlined_call_operand.vmem [shape: bf16[2,32,32], index: 3, kind: input, shape index: {}]
  %s4 = inlined_call_operand.vmem [shape: bf16[2,32,64], index: 4, kind: input, shape index: {}]
  %s5 = inlined_call_operand.vmem [shape: f32[2,1,64], index: 5, kind: input, shape index: {}]
  %s6 = inlined_call_operand.vmem [shape: bf16[2,64,32], index: 6, kind: input, shape index: {}]
  %s7 = inlined_call_operand.vmem [shape: f32[2,9,32], index: 7, kind: input, shape index: {}]
  %s8 = inlined_call_operand.hbm [shape: f32[2,8,32], index: 8, kind: output, shape index: {}]
  %s9 = sld [smem:[#allocation0]]
  $region73: #{tpu_custom_call.1} parent=0
    _
  %s11 = ssub.s32 1, %s9
  %s12 = scalar_select 0, %s11, %s9
  $region1: #{tpu_custom_call.1} parent=0
    #allocation2 [shape = 'u8[4096]{0}', space=vmem, size = 0x1000, scoped, tag = 'input window, operand 1, single buffered']
    #allocation3 [shape = 's32[2]{0}', space=sflag, size = 0x8, scoped, tag = 'scoped memory for tpu_custom_call.1']
    #allocation4 [shape = 's32[2]{0}', space=sflag, size = 0x8, scoped, tag = 'scoped memory for tpu_custom_call.1']
    #allocation5 [shape = 'u8[8192]{0}', space=vmem, size = 0x2000, scoped, tag = 'output window, operand 0, single buffered']
    %13 = vsyncpa [#allocation3], 0
    %14 = vsyncpa [#allocation4], 0
    loop: start=0, step=1, limit=4
    $region2: #{tpu_custom_call.1} parent=1 // loop_pre_header
      _
    $region3: #{tpu_custom_call.1} parent=1 // loop_header
      %s16 = sphi 0, %s20
      %p17 = scmp.ge.s32.totalorder %s16, 4
      %s23 = sphi 0, %s35
      %s24 = sphi 0, %s31
      %s25 = sphi 0, %s23
      %s26 = sphi 0, %s24
      %s27 = sphi 0, %s25
      %s28 = sphi 0, %s26
      %s38 = sphi 0, %s40
      %s41 = sphi 0, %s38
      %s42 = sphi 0, %s41
      %s58 = sphi 0, %s42
      %s64 = sphi 0, %s66
      %s67 = sphi 0, %s64
      %s68 = sphi 0, %s67
      %s84 = sphi 0, %s68
      %s90 = sphi 0, %s92
      %s93 = sphi 0, %s90
      %s94 = sphi 0, %s93
      %s110 = sphi 0, %s94
      %s116 = sphi 0, %s118
      %s119 = sphi 0, %s116
      %s120 = sphi 0, %s119
      %s136 = sphi 0, %s120
      %s142 = sphi 0, %s144
      %s145 = sphi 0, %s142
      %s146 = sphi 0, %s145
      %s162 = sphi 0, %s146
      %s168 = sphi 0, %s170
      %s171 = sphi 0, %s168
      %s172 = sphi 0, %s171
      %s188 = sphi 0, %s172
      %s194 = sphi 0, %s196
      %s197 = sphi 0, %s194
      %s198 = sphi 0, %s197
      %s214 = sphi 0, %s198
      %s220 = sphi 0, %s222
      %s223 = sphi 0, %s220
      %s224 = sphi 0, %s223
      %s240 = sphi 0, %s224
      %s246 = sphi 0, %s248
      %s249 = sphi 0, %s246
      %s250 = sphi 0, %s249
      %s266 = sphi 0, %s250
    $region4: #{tpu_custom_call.1} parent=1 // loop_header_branch
      %19 = sbr.rel (%p17) target = $region8
    $region5: #{tpu_custom_call.1} parent=1 // loop_body
      %s21 = ssub.s32 %s16, 1
      %s22 = ssub.s32 %s16, 2
      %s29 = sadd.s32 1, %s24
      %p30 = scmp.ge.s32.totalorder %s29, 2
      %s31 = scalar_select %p30, 0, %s29
      %s32 = sadd.s32 1, %s23
      %s33 = scalar_select %p30, %s32, %s23
      %p34 = scmp.ge.s32.totalorder %s33, 1
      %s35 = scalar_select %p34, 0, %s33
      %s36 = ssub.s32 %s23, %s35
      %p37 = scmp.eq.s32.totalorder %s36, 0
      %s39 = sadd.s32 %s38, 1
      %s40 = scalar_select %p37, %s38, %s39
      %p43 = pneg %p37
      %p44 = scmp.eq.s32.totalorder %s16, 1
      %p45 = por %p43, %p44
      %p46 = scmp.ne.s32.totalorder %s38, %s41
      %p47 = scmp.eq.s32.totalorder %s16, 0
      %p48 = por %p46, %p47
      %p49 = scmp.ne.s32.totalorder %s38, %s41
      %p50 = scmp.eq.s32.totalorder %s21, 1
      %p51 = por %p49, %p50
      %p52 = scmp.ne.s32.totalorder %s41, %s42
      %p53 = scmp.eq.s32.totalorder %s21, 0
      %p54 = por %p52, %p53
      %p55 = scmp.ne.s32.totalorder %s41, %s42
      %p56 = scmp.eq.s32.totalorder %s22, 1
      %p57 = por %p55, %p56
      %p59 = scmp.ne.s32.totalorder %s42, %s58
      %p60 = scmp.eq.s32.totalorder %s22, 0
      %p61 = por %p59, %p60
      %s62 = ssub.s32 %s23, %s35
      %p63 = scmp.eq.s32.totalorder %s62, 0
      %s65 = sadd.s32 %s64, 1
      %s66 = scalar_select %p63, %s64, %s65
      %p69 = pneg %p63
      %p70 = scmp.eq.s32.totalorder %s16, 1
      %p71 = por %p69, %p70
      %p72 = scmp.ne.s32.totalorder %s64, %s67
      %p73 = scmp.eq.s32.totalorder %s16, 0
      %p74 = por %p72, %p73
      %p75 = scmp.ne.s32.totalorder %s64, %s67
      %p76 = scmp.eq.s32.totalorder %s21, 1
      %p77 = por %p75, %p76
      %p78 = scmp.ne.s32.totalorder %s67, %s68
      %p79 = scmp.eq.s32.totalorder %s21, 0
      %p80 = por %p78, %p79
      %p81 = scmp.ne.s32.totalorder %s67, %s68
      %p82 = scmp.eq.s32.totalorder %s22, 1
      %p83 = por %p81, %p82
      %p85 = scmp.ne.s32.totalorder %s68, %s84
      %p86 = scmp.eq.s32.totalorder %s22, 0
      %p87 = por %p85, %p86
      %s88 = ssub.s32 %s24, %s31
      %p89 = scmp.eq.s32.totalorder %s88, 0
      %s91 = sadd.s32 %s90, 1
      %s92 = scalar_select %p89, %s90, %s91
      %p95 = pneg %p89
      %p96 = scmp.eq.s32.totalorder %s16, 1
      %p97 = por %p95, %p96
      %p98 = scmp.ne.s32.totalorder %s90, %s93
      %p99 = scmp.eq.s32.totalorder %s16, 0
      %p100 = por %p98, %p99
      %p101 = scmp.ne.s32.totalorder %s90, %s93
      %p102 = scmp.eq.s32.totalorder %s21, 1
      %p103 = por %p101, %p102
      %p104 = scmp.ne.s32.totalorder %s93, %s94
      %p105 = scmp.eq.s32.totalorder %s21, 0
      %p106 = por %p104, %p105
      %p107 = scmp.ne.s32.totalorder %s93, %s94
      %p108 = scmp.eq.s32.totalorder %s22, 1
      %p109 = por %p107, %p108
      %p111 = scmp.ne.s32.totalorder %s94, %s110
      %p112 = scmp.eq.s32.totalorder %s22, 0
      %p113 = por %p111, %p112
      %s114 = ssub.s32 %s24, %s31
      %p115 = scmp.eq.s32.totalorder %s114, 0
      %s117 = sadd.s32 %s116, 1
      %s118 = scalar_select %p115, %s116, %s117
      %p121 = pneg %p115
      %p122 = scmp.eq.s32.totalorder %s16, 1
      %p123 = por %p121, %p122
      %p124 = scmp.ne.s32.totalorder %s116, %s119
      %p125 = scmp.eq.s32.totalorder %s16, 0
      %p126 = por %p124, %p125
      %p127 = scmp.ne.s32.totalorder %s116, %s119
      %p128 = scmp.eq.s32.totalorder %s21, 1
      %p129 = por %p127, %p128
      %p130 = scmp.ne.s32.totalorder %s119, %s120
      %p131 = scmp.eq.s32.totalorder %s21, 0
      %p132 = por %p130, %p131
      %p133 = scmp.ne.s32.totalorder %s119, %s120
      %p134 = scmp.eq.s32.totalorder %s22, 1
      %p135 = por %p133, %p134
      %p137 = scmp.ne.s32.totalorder %s120, %s136
      %p138 = scmp.eq.s32.totalorder %s22, 0
      %p139 = por %p137, %p138
      %s140 = ssub.s32 %s24, %s31
      %p141 = scmp.eq.s32.totalorder %s140, 0
      %s143 = sadd.s32 %s142, 1
      %s144 = scalar_select %p141, %s142, %s143
      %p147 = pneg %p141
      %p148 = scmp.eq.s32.totalorder %s16, 1
      %p149 = por %p147, %p148
      %p150 = scmp.ne.s32.totalorder %s142, %s145
      %p151 = scmp.eq.s32.totalorder %s16, 0
      %p152 = por %p150, %p151
      %p153 = scmp.ne.s32.totalorder %s142, %s145
      %p154 = scmp.eq.s32.totalorder %s21, 1
      %p155 = por %p153, %p154
      %p156 = scmp.ne.s32.totalorder %s145, %s146
      %p157 = scmp.eq.s32.totalorder %s21, 0
      %p158 = por %p156, %p157
      %p159 = scmp.ne.s32.totalorder %s145, %s146
      %p160 = scmp.eq.s32.totalorder %s22, 1
      %p161 = por %p159, %p160
      %p163 = scmp.ne.s32.totalorder %s146, %s162
      %p164 = scmp.eq.s32.totalorder %s22, 0
      %p165 = por %p163, %p164
      %s166 = ssub.s32 %s24, %s31
      %p167 = scmp.eq.s32.totalorder %s166, 0
      %s169 = sadd.s32 %s168, 1
      %s170 = scalar_select %p167, %s168, %s169
      %p173 = pneg %p167
      %p174 = scmp.eq.s32.totalorder %s16, 1
      %p175 = por %p173, %p174
      %p176 = scmp.ne.s32.totalorder %s168, %s171
      %p177 = scmp.eq.s32.totalorder %s16, 0
      %p178 = por %p176, %p177
      %p179 = scmp.ne.s32.totalorder %s168, %s171
      %p180 = scmp.eq.s32.totalorder %s21, 1
      %p181 = por %p179, %p180
      %p182 = scmp.ne.s32.totalorder %s171, %s172
      %p183 = scmp.eq.s32.totalorder %s21, 0
      %p184 = por %p182, %p183
      %p185 = scmp.ne.s32.totalorder %s171, %s172
      %p186 = scmp.eq.s32.totalorder %s22, 1
      %p187 = por %p185, %p186
      %p189 = scmp.ne.s32.totalorder %s172, %s188
      %p190 = scmp.eq.s32.totalorder %s22, 0
      %p191 = por %p189, %p190
      %s192 = ssub.s32 %s24, %s31
      %p193 = scmp.eq.s32.totalorder %s192, 0
      %s195 = sadd.s32 %s194, 1
      %s196 = scalar_select %p193, %s194, %s195
      %p199 = pneg %p193
      %p200 = scmp.eq.s32.totalorder %s16, 1
      %p201 = por %p199, %p200
      %p202 = scmp.ne.s32.totalorder %s194, %s197
      %p203 = scmp.eq.s32.totalorder %s16, 0
      %p204 = por %p202, %p203
      %p205 = scmp.ne.s32.totalorder %s194, %s197
      %p206 = scmp.eq.s32.totalorder %s21, 1
      %p207 = por %p205, %p206
      %p208 = scmp.ne.s32.totalorder %s197, %s198
      %p209 = scmp.eq.s32.totalorder %s21, 0
      %p210 = por %p208, %p209
      %p211 = scmp.ne.s32.totalorder %s197, %s198
      %p212 = scmp.eq.s32.totalorder %s22, 1
      %p213 = por %p211, %p212
      %p215 = scmp.ne.s32.totalorder %s198, %s214
      %p216 = scmp.eq.s32.totalorder %s22, 0
      %p217 = por %p215, %p216
      %s218 = ssub.s32 %s24, %s31
      %p219 = scmp.eq.s32.totalorder %s218, 0
      %s221 = sadd.s32 %s220, 1
      %s222 = scalar_select %p219, %s220, %s221
      %p225 = pneg %p219
      %p226 = scmp.eq.s32.totalorder %s16, 1
      %p227 = por %p225, %p226
      %p228 = scmp.ne.s32.totalorder %s220, %s223
      %p229 = scmp.eq.s32.totalorder %s16, 0
      %p230 = por %p228, %p229
      %p231 = scmp.ne.s32.totalorder %s220, %s223
      %p232 = scmp.eq.s32.totalorder %s21, 1
      %p233 = por %p231, %p232
      %p234 = scmp.ne.s32.totalorder %s223, %s224
      %p235 = scmp.eq.s32.totalorder %s21, 0
      %p236 = por %p234, %p235
      %p237 = scmp.ne.s32.totalorder %s223, %s224
      %p238 = scmp.eq.s32.totalorder %s22, 1
      %p239 = por %p237, %p238
      %p241 = scmp.ne.s32.totalorder %s224, %s240
      %p242 = scmp.eq.s32.totalorder %s22, 0
      %p243 = por %p241, %p242
      %s244 = ssub.s32 %s23, %s35
      %p245 = scmp.eq.s32.totalorder %s244, 0
      %s247 = sadd.s32 %s246, 1
      %s248 = scalar_select %p245, %s246, %s247
      %p251 = pneg %p245
      %p252 = scmp.eq.s32.totalorder %s16, 1
      %p253 = por %p251, %p252
      %p254 = scmp.ne.s32.totalorder %s246, %s249
      %p255 = scmp.eq.s32.totalorder %s16, 0
      %p256 = por %p254, %p255
      %p257 = scmp.ne.s32.totalorder %s246, %s249
      %p258 = scmp.eq.s32.totalorder %s21, 1
      %p259 = por %p257, %p258
      %p260 = scmp.ne.s32.totalorder %s249, %s250
      %p261 = scmp.eq.s32.totalorder %s21, 0
      %p262 = por %p260, %p261
      %p263 = scmp.ne.s32.totalorder %s249, %s250
      %p264 = scmp.eq.s32.totalorder %s22, 1
      %p265 = por %p263, %p264
      %p267 = scmp.ne.s32.totalorder %s250, %s266
      %p268 = scmp.eq.s32.totalorder %s22, 0
      %p269 = por %p267, %p268
      %p270 = scmp.le.s32.totalorder 1, %s16
      %p271 = scmp.lt.s32.totalorder %s16, 3
      %p272 = pnand %p270, %p271
      %p273 = pneg %p272
      // Predicated region
      $region9: #{tpu_custom_call.1} parent=5 // pred_check
        _
      $region10: #{tpu_custom_call.1} parent=5 // pred_check_branch
        %275 = sbr.rel (%p272) target = $region12
      $region11: #{tpu_custom_call.1} parent=5 // pred_region
        %s276 = ssub.s32 %s16, 1
        // Predicated region
        $region13: #{tpu_custom_call.1} parent=11 // pred_check
          %p277 = pneg %p54
        $region14: #{tpu_custom_call.1} parent=11 // pred_check_branch
          %279 = sbr.rel (%p277) target = $region16
        $region15: #{tpu_custom_call.1} parent=11 // pred_region
          %s280 = smul.u32 2, %s25
          %p281 = scmp.lt.s32.totalorder %s280, 1
          %s282 = scalar_select %p281, %s280, 1
          %s283 = smul.addr %s282, 8
          %s284 = scalar_lea.vmem %s0, %s283
          %s285 = smul.u32 2, %s25
        $region16: #{tpu_custom_call.1} parent=11 // pred_fallthru
          _
        // Predicated region
        $region17: #{tpu_custom_call.1} parent=11 // pred_check
          %p286 = pneg %p80
        $region18: #{tpu_custom_call.1} parent=11 // pred_check_branch
          %288 = sbr.rel (%p286) target = $region20
        $region19: #{tpu_custom_call.1} parent=11 // pred_region
          %s289 = smul.u32 2, %s25
          %291 = vsyncadd [#allocation3], 0
          %s292 = smul.addr %s289, 4
          %s293 = scalar_lea.hbm %s1, %s292
          %s294 = sshll.u32 %s293, 4
          %s295 = int_to_ptr.hbm [resolvable:$true] %s294
          %s296 = sshll.u32 [#allocation2], 4
          %s297 = int_to_ptr.vmem [resolvable:$true] %s296
          %302 = dma.hbm_to_vmem [thread:$0]  %s295, 128, %s297, [#allocation3], 64, 64, 4
        $region20: #{tpu_custom_call.1} parent=11 // pred_fallthru
          _
      $region12: #{tpu_custom_call.1} parent=5 // pred_fallthru
        _
      %p303 = scmp.lt.s32.totalorder %s16, 2
      // Predicated region
      $region21: #{tpu_custom_call.1} parent=5 // pred_check
        %p304 = pneg %p303
      $region22: #{tpu_custom_call.1} parent=5 // pred_check_branch
        %306 = sbr.rel (%p304) target = $region24
      $region23: #{tpu_custom_call.1} parent=5 // pred_region
        // Predicated region
        $region25: #{tpu_custom_call.1} parent=23 // pred_check
          %p307 = pneg %p100
        $region26: #{tpu_custom_call.1} parent=23 // pred_check_branch
          %309 = sbr.rel (%p307) target = $region28
        $region27: #{tpu_custom_call.1} parent=23 // pred_region
          %p310 = scmp.lt.s32.totalorder %s24, 1
          %s311 = scalar_select %p310, %s24, 1
          %s312 = smul.addr %s311, 4
          %s313 = smul.addr %s312, 4
          %s314 = scalar_lea.vmem %s2, %s313
        $region28: #{tpu_custom_call.1} parent=23 // pred_fallthru
          _
        // Predicated region
        $region29: #{tpu_custom_call.1} parent=23 // pred_check
          %p315 = pneg %p126
        $region30: #{tpu_custom_call.1} parent=23 // pred_check_branch
          %317 = sbr.rel (%p315) target = $region32
        $region31: #{tpu_custom_call.1} parent=23 // pred_region
          %p318 = scmp.lt.s32.totalorder %s24, 1
          %s319 = scalar_select %p318, %s24, 1
          %s320 = smul.addr %s319, 4
          %s321 = smul.addr %s320, 4
          %s322 = scalar_lea.vmem %s3, %s321
        $region32: #{tpu_custom_call.1} parent=23 // pred_fallthru
          _
        // Predicated region
        $region33: #{tpu_custom_call.1} parent=23 // pred_check
          %p323 = pneg %p152
        $region34: #{tpu_custom_call.1} parent=23 // pred_check_branch
          %325 = sbr.rel (%p323) target = $region36
        $region35: #{tpu_custom_call.1} parent=23 // pred_region
          %p326 = scmp.lt.s32.totalorder %s24, 1
          %s327 = scalar_select %p326, %s24, 1
          %s328 = smul.addr %s327, 4
          %s329 = smul.addr %s328, 4
          %s330 = scalar_lea.vmem %s4, %s329
        $region36: #{tpu_custom_call.1} parent=23 // pred_fallthru
          _
        // Predicated region
        $region37: #{tpu_custom_call.1} parent=23 // pred_check
          %p331 = pneg %p178
        $region38: #{tpu_custom_call.1} parent=23 // pred_check_branch
          %333 = sbr.rel (%p331) target = $region40
        $region39: #{tpu_custom_call.1} parent=23 // pred_region
          %p334 = scmp.lt.s32.totalorder %s24, 1
          %s335 = scalar_select %p334, %s24, 1
          %s336 = scalar_lea.vmem %s5, %s335
        $region40: #{tpu_custom_call.1} parent=23 // pred_fallthru
          _
        // Predicated region
        $region41: #{tpu_custom_call.1} parent=23 // pred_check
          %p337 = pneg %p204
        $region42: #{tpu_custom_call.1} parent=23 // pred_check_branch
          %339 = sbr.rel (%p337) target = $region44
        $region43: #{tpu_custom_call.1} parent=23 // pred_region
          %p340 = scmp.lt.s32.totalorder %s24, 1
          %s341 = scalar_select %p340, %s24, 1
          %s342 = smul.addr %s341, 8
          %s343 = smul.addr %s342, 4
          %s344 = scalar_lea.vmem %s6, %s343
        $region44: #{tpu_custom_call.1} parent=23 // pred_fallthru
          _
        // Predicated region
        $region45: #{tpu_custom_call.1} parent=23 // pred_check
          %p345 = pneg %p230
        $region46: #{tpu_custom_call.1} parent=23 // pred_check_branch
          %347 = sbr.rel (%p345) target = $region48
        $region47: #{tpu_custom_call.1} parent=23 // pred_region
          %p348 = scmp.lt.s32.totalorder %s24, 1
          %s349 = scalar_select %p348, %s24, 1
          %s350 = smul.addr %s349, 2
          %s351 = smul.addr %s350, 8
          %s352 = scalar_lea.vmem %s7, %s351
        $region48: #{tpu_custom_call.1} parent=23 // pred_fallthru
          _
      $region24: #{tpu_custom_call.1} parent=5 // pred_fallthru
        _
      %p353 = scmp.le.s32.totalorder 1, %s16
      %p354 = scmp.lt.s32.totalorder %s16, 3
      %p355 = pnand %p353, %p354
      %p356 = pneg %p355
      // Predicated region
      $region49: #{tpu_custom_call.1} parent=5 // pred_check
        _
      $region50: #{tpu_custom_call.1} parent=5 // pred_check_branch
        %358 = sbr.rel (%p355) target = $region52
      $region51: #{tpu_custom_call.1} parent=5 // pred_region
        %s359 = ssub.s32 %s16, 1
        // Predicated region
        $region53: #{tpu_custom_call.1} parent=51 // pred_check
          %p360 = pneg %p80
        $region54: #{tpu_custom_call.1} parent=51 // pred_check_branch
          %362 = sbr.rel (%p360) target = $region56
        $region55: #{tpu_custom_call.1} parent=51 // pred_region
          %364 = dma.done [#allocation3], 128
        $region56: #{tpu_custom_call.1} parent=51 // pred_fallthru
          _
        %s365 = smul.u32 2, %s25
        %p366 = scmp.lt.s32.totalorder %s365, 1
        %s367 = scalar_select %p366, %s365, 1
        %s368 = smul.addr %s367, 8
        %s369 = scalar_lea.vmem %s0, %s368
        %p370 = pneg %p54
        %p371 = pneg %p51
        %p372 = pneg %p80
        %p373 = pneg %p77
        %p374 = scmp.lt.s32.totalorder %s26, 1
        %s375 = scalar_select %p374, %s26, 1
        %s376 = smul.addr %s375, 4
        %s377 = smul.addr %s376, 4
        %s378 = scalar_lea.vmem %s2, %s377
        %p379 = pneg %p106
        %p380 = pneg %p103
        %p381 = scmp.lt.s32.totalorder %s26, 1
        %s382 = scalar_select %p381, %s26, 1
        %s383 = smul.addr %s382, 4
        %s384 = smul.addr %s383, 4
        %s385 = scalar_lea.vmem %s3, %s384
        %p386 = pneg %p132
        %p387 = pneg %p129
        %p388 = scmp.lt.s32.totalorder %s26, 1
        %s389 = scalar_select %p388, %s26, 1
        %s390 = smul.addr %s389, 4
        %s391 = smul.addr %s390, 4
        %s392 = scalar_lea.vmem %s4, %s391
        %p393 = pneg %p158
        %p394 = pneg %p155
        %p395 = scmp.lt.s32.totalorder %s26, 1
        %s396 = scalar_select %p395, %s26, 1
        %s397 = scalar_lea.vmem %s5, %s396
        %p398 = pneg %p184
        %p399 = pneg %p181
        %p400 = scmp.lt.s32.totalorder %s26, 1
        %s401 = scalar_select %p400, %s26, 1
        %s402 = smul.addr %s401, 8
        %s403 = smul.addr %s402, 4
        %s404 = scalar_lea.vmem %s6, %s403
        %p405 = pneg %p210
        %p406 = pneg %p207
        %p407 = scmp.lt.s32.totalorder %s26, 1
        %s408 = scalar_select %p407, %s26, 1
        %s409 = smul.addr %s408, 2
        %s410 = smul.addr %s409, 8
        %s411 = scalar_lea.vmem %s7, %s410
        %p412 = pneg %p236
        %p413 = pneg %p233
        %p414 = pneg %p262
        %p415 = pneg %p259
        %s416 = smul.u32 2, %s25
        %p417 = scmp.lt.s32.totalorder %s416, 1
        %s418 = scalar_select %p417, %s416, 1
        %s419 = smul.addr %s418, 8
        %s420 = scalar_lea.vmem %s0, %s419
        %s421 = smul.u32 2, %s25
        %s422 = smul.u32 2, %s25
        %p423 = scmp.lt.s32.totalorder %s26, 1
        %s424 = scalar_select %p423, %s26, 1
        %s425 = smul.addr %s424, 4
        %s426 = smul.addr %s425, 4
        %s427 = scalar_lea.vmem %s2, %s426
        %p428 = scmp.lt.s32.totalorder %s26, 1
        %s429 = scalar_select %p428, %s26, 1
        %s430 = smul.addr %s429, 4
        %s431 = smul.addr %s430, 4
        %s432 = scalar_lea.vmem %s3, %s431
        %p433 = scmp.lt.s32.totalorder %s26, 1
        %s434 = scalar_select %p433, %s26, 1
        %s435 = smul.addr %s434, 4
        %s436 = smul.addr %s435, 4
        %s437 = scalar_lea.vmem %s4, %s436
        %p438 = scmp.lt.s32.totalorder %s26, 1
        %s439 = scalar_select %p438, %s26, 1
        %s440 = scalar_lea.vmem %s5, %s439
        %p441 = scmp.lt.s32.totalorder %s26, 1
        %s442 = scalar_select %p441, %s26, 1
        %s443 = smul.addr %s442, 8
        %s444 = smul.addr %s443, 4
        %s445 = scalar_lea.vmem %s6, %s444
        %p446 = scmp.lt.s32.totalorder %s26, 1
        %s447 = scalar_select %p446, %s26, 1
        %s448 = smul.addr %s447, 2
        %s449 = smul.addr %s448, 8
        %s450 = scalar_lea.vmem %s7, %s449
        %s451 = smul.u32 2, %s25
        %p453 = scmp.eq.s32.totalorder %s26, 0
        // Predicated region
        $region57: #{tpu_custom_call.1} parent=51 // pred_check
          %p454 = pneg %p453
        $region58: #{tpu_custom_call.1} parent=51 // pred_check_branch
          %456 = sbr.rel (%p454) target = $region60
        $region59: #{tpu_custom_call.1} parent=51 // pred_region
          %v457 = vld [vmem:[%s420] sm:$0xff]
          %v458 = vld [vmem:[%s420 + $0x8] sm:$0xff]
          %vm459 = vcmask 261120
          %460 = vst.msk [vmem:[#allocation5] sm:$0xff] %vm459, %v457
          %461 = vst.msk [vmem:[#allocation5 + $0x8] sm:$0xff] %vm459, %v458
        $region60: #{tpu_custom_call.1} parent=51 // pred_fallthru
          _
        %v462 = vld [vmem:[#allocation5] sm:$0xff]
        %v463 = vld [vmem:[#allocation5 + $0x8] sm:$0xff]
        %v464 = vld [vmem:[%s450] sm:$0xff]
        %v465 = vld [vmem:[%s450 + $0x8] sm:$0x1]
        %v466 = vpack.c.bf16 %v463, %v462
        %v467 = vld [vmem:[%s427] sm:$0xf]
        %v468 = vld [vmem:[%s427 + $0x4] sm:$0xf]
        %v469 = vld [vmem:[%s427 + $0x8] sm:$0xf]
        %v470 = vld [vmem:[%s427 + $0xc] sm:$0xf]
        %v475 = vunpack.c.l.b16 %v467
        %v476 = vunpack.c.l.b16 %v468
        %v477 = vunpack.c.l.b16 %v469
        %v478 = vunpack.c.l.b16 %v470
        %v479 = vpack.c.b16 %v476, %v475
        %v480 = vpack.c.b16 %v478, %v477
        %vm483 = vcmask 261120
        %v485 = vsel %vm483, %v466, 0
        %487 = vmatpush.bf16.msra.mxu0 0
        %488 = vmatpush.bf16.msra.mxu0 0
        %489 = vmatpush.bf16.msra.mxu0 0
        %490 = vmatpush.bf16.msra.mxu0 0
        %491 = vmatpush.bf16.msra.mxu0 0
        %492 = vmatpush.bf16.msra.mxu0 0
        %493 = vmatpush.bf16.msra.mxu0 %v480
        %494 = vmatpush.bf16.msra.mxu0 %v479
        %495 = vmatmul.bf16.gmra.mxu0 %v485
        %v496 = vpop.f32.mrf.mxu0
        %v497 = vadd.f32 0.0, %v496
        %v498 = vpop.f32.mrf.mxu0
        %v499 = vadd.f32 0.0, %v498
        %500 = vdwg.mxu0
        %v501 = vperm.slane %v464, 0
        %v502 = vadd.f32 %v497, %v501
        %v503 = vadd.f32 %v499, %v501
        %v504 = vpack.c.bf16 %v502, %v502
        %v505 = vpack.c.bf16 %v503, %v503
        %v506 = vperm.slane %v464, 1
        %508 = vrot.lane.b32.xlu0 %v506, 32
        %v509 = vpop.permute.xlu0 %508
        %v511 = vadd.f32 %v497, %v509
        %v512 = vadd.f32 %v499, %v509
        %v513 = vpack.c.bf16 %v511, %v511
        %v514 = vpack.c.bf16 %v512, %v512
        %v515 = vperm.slane %v464, 2
        %517 = vrot.lane.b32.xlu0 %v515, 64
        %v518 = vpop.permute.xlu0 %517
        %v520 = vadd.f32 %v497, %v518
        %v521 = vadd.f32 %v499, %v518
        %v522 = vpack.c.bf16 %v520, %v520
        %v523 = vpack.c.bf16 %v521, %v521
        %v524 = vld [vmem:[#allocation2] sm:$0xf]
        %v525 = vld [vmem:[#allocation2 + $0x4] sm:$0xf]
        %v526 = vunpack.c.l.bf16 %v524
        %v527 = vunpack.c.l.bf16 %v525
        %vm528 = vcmp.ne.f32.partialorder %v526, 0.0
        %vm529 = vcmp.ne.f32.partialorder %v527, 0.0
        %v530 = vsel %vm528, 0.0, -1e+30
        %v531 = vsel %vm529, 0.0, -1e+30
        %v533 = vunpack.c.l.b16 %v513
        %v534 = vpack.c.b16 %v533, %v533
        %535 = vrot.lane.b32.xlu0 %v534, 96
        %v536 = vpop.permute.xlu0 %535
        %vm537 = vcmask 64512
        %v539 = vsel %vm537, %v504, 0
        %v542 = vsel %vm537, %v536, 0
        %544 = vmatpush.bf16.xpose.msra.mxu0 0
        %545 = vmatpush.bf16.xpose.msra.mxu0 0
        %546 = vmatpush.bf16.xpose.msra.mxu0 0
        %547 = vmatpush.bf16.xpose.msra.mxu0 0
        %548 = vmatpush.bf16.xpose.msra.mxu0 0
        %549 = vmatpush.bf16.xpose.msra.mxu0 0
        %550 = vmatpush.bf16.xpose.msra.mxu0 0
        %551 = vmatpush.bf16.xpose.msra.mxu0 %v542
        %552 = vmatmul.bf16.gmra.mxu0 %v539
        %v553 = vpop.f32.mrf.mxu0
        %v554 = vadd.f32 %v530, %v553
        %v555 = vpop.f32.mrf.mxu0
        %556 = vdwg.mxu0
        %v558 = vunpack.c.l.b16 %v514
        %v559 = vpack.c.b16 %v558, %v558
        %560 = vrot.lane.b32.xlu0 %v559, 96
        %v561 = vpop.permute.xlu0 %560
        %v563 = vsel %vm537, %v505, 0
        %v566 = vsel %vm537, %v561, 0
        %568 = vmatpush.bf16.xpose.msra.mxu0 0
        %569 = vmatpush.bf16.xpose.msra.mxu0 0
        %570 = vmatpush.bf16.xpose.msra.mxu0 0
        %571 = vmatpush.bf16.xpose.msra.mxu0 0
        %572 = vmatpush.bf16.xpose.msra.mxu0 0
        %573 = vmatpush.bf16.xpose.msra.mxu0 0
        %574 = vmatpush.bf16.xpose.msra.mxu0 0
        %575 = vmatpush.bf16.xpose.msra.mxu0 %v566
        %576 = vmatmul.bf16.gmra.mxu0 %v563
        %v577 = vpop.f32.mrf.mxu0
        %v578 = vadd.f32 %v531, %v577
        %v579 = vpop.f32.mrf.mxu0
        %580 = vdwg.mxu0
        %v581 = vsel %vm537, %v554, -inf
        %582 = vmax.xlane.f32.xlu0 %v581
        %v583 = vpop.xlane.xlu0 %582
        %v584 = vsel %vm537, %v578, -inf
        %585 = vmax.xlane.f32.xlu0 %v584
        %v586 = vpop.xlane.xlu0 %585
        %v587 = vsub.f32 %v554, %v583
        %v588 = vsub.f32 %v578, %v586
        %v589 = vmul.f32 %v587, 1.442695
        %v590 = vpow.pop %v589
        %v591 = vmul.f32 %v588, 1.442695
        %v592 = vpow.pop %v591
        %v593 = vsel %vm537, %v590, 0.0
        %594 = vadd.xlane.f32.xlu0 %v593
        %v595 = vpop.xlane.xlu0 %594
        %v596 = vsel %vm537, %v592, 0.0
        %597 = vadd.xlane.f32.xlu0 %v596
        %v598 = vpop.xlane.xlu0 %597
        %v599 = vrcp.pop %v595
        %v600 = vrcp.pop %v598
        %v601 = vmul.f32 %v590, %v599
        %v602 = vmul.f32 %v592, %v600
        %v603 = vpack.c.bf16 %v601, %v601
        %v604 = vpack.c.bf16 %v602, %v602
        %v606 = vunpack.c.l.b16 %v522
        %v607 = vpack.c.b16 %v606, %v606
        %608 = vrot.lane.b32.xlu0 %v607, 64
        %v609 = vpop.permute.xlu0 %608
        %v611 = vsel %vm537, %v603, 0
        %vm613 = vcmask 1043456
        %v615 = vsel %vm613, %v609, 0
        %617 = vmatpush.bf16.msra.mxu0 0
        %618 = vmatpush.bf16.msra.mxu0 0
        %619 = vmatpush.bf16.msra.mxu0 0
        %620 = vmatpush.bf16.msra.mxu0 0
        %621 = vmatpush.bf16.msra.mxu0 0
        %622 = vmatpush.bf16.msra.mxu0 0
        %623 = vmatpush.bf16.msra.mxu0 0
        %624 = vmatpush.bf16.msra.mxu0 %v615
        %625 = vmatmul.bf16.gmra.mxu0 %v611
        %v626 = vpop.f32.mrf.mxu0
        %v627 = vadd.f32 0.0, %v626
        %v628 = vpop.f32.mrf.mxu0
        %629 = vdwg.mxu0
        %v631 = vunpack.c.l.b16 %v523
        %v632 = vpack.c.b16 %v631, %v631
        %633 = vrot.lane.b32.xlu0 %v632, 64
        %v634 = vpop.permute.xlu0 %633
        %v636 = vsel %vm537, %v604, 0
        %v639 = vsel %vm613, %v634, 0
        %641 = vmatpush.bf16.msra.mxu0 0
        %642 = vmatpush.bf16.msra.mxu0 0
        %643 = vmatpush.bf16.msra.mxu0 0
        %644 = vmatpush.bf16.msra.mxu0 0
        %645 = vmatpush.bf16.msra.mxu0 0
        %646 = vmatpush.bf16.msra.mxu0 0
        %647 = vmatpush.bf16.msra.mxu0 0
        %648 = vmatpush.bf16.msra.mxu0 %v639
        %649 = vmatmul.bf16.gmra.mxu0 %v636
        %v650 = vpop.f32.mrf.mxu0
        %v651 = vadd.f32 0.0, %v650
        %v652 = vpop.f32.mrf.mxu0
        %653 = vdwg.mxu0
        %v655 = vunpack.c.l.b16 %v504
        %v656 = vpack.c.b16 %v655, %v655
        %657 = vrot.lane.b32.xlu0 %v656, 120
        %v658 = vpop.permute.xlu0 %657
        %659 = vrot.lane.b32.xlu0 %v534, 88
        %v660 = vpop.permute.xlu0 %659
        %v662 = vsel %vm537, %v658, 0
        %v665 = vsel %vm537, %v660, 0
        %667 = vmatpush.bf16.xpose.msra.mxu0 0
        %668 = vmatpush.bf16.xpose.msra.mxu0 0
        %669 = vmatpush.bf16.xpose.msra.mxu0 0
        %670 = vmatpush.bf16.xpose.msra.mxu0 0
        %671 = vmatpush.bf16.xpose.msra.mxu0 0
        %672 = vmatpush.bf16.xpose.msra.mxu0 0
        %673 = vmatpush.bf16.xpose.msra.mxu0 0
        %674 = vmatpush.bf16.xpose.msra.mxu0 %v665
        %675 = vmatmul.bf16.gmra.mxu0 %v662
        %v676 = vpop.f32.mrf.mxu0
        %v677 = vadd.f32 %v530, %v676
        %v678 = vpop.f32.mrf.mxu0
        %679 = vdwg.mxu0
        %v681 = vunpack.c.l.b16 %v505
        %v682 = vpack.c.b16 %v681, %v681
        %683 = vrot.lane.b32.xlu0 %v682, 120
        %v684 = vpop.permute.xlu0 %683
        %685 = vrot.lane.b32.xlu0 %v559, 88
        %v686 = vpop.permute.xlu0 %685
        %v688 = vsel %vm537, %v684, 0
        %v691 = vsel %vm537, %v686, 0
        %693 = vmatpush.bf16.xpose.msra.mxu0 0
        %694 = vmatpush.bf16.xpose.msra.mxu0 0
        %695 = vmatpush.bf16.xpose.msra.mxu0 0
        %696 = vmatpush.bf16.xpose.msra.mxu0 0
        %697 = vmatpush.bf16.xpose.msra.mxu0 0
        %698 = vmatpush.bf16.xpose.msra.mxu0 0
        %699 = vmatpush.bf16.xpose.msra.mxu0 0
        %700 = vmatpush.bf16.xpose.msra.mxu0 %v691
        %701 = vmatmul.bf16.gmra.mxu0 %v688
        %v702 = vpop.f32.mrf.mxu0
        %v703 = vadd.f32 %v531, %v702
        %v704 = vpop.f32.mrf.mxu0
        %705 = vdwg.mxu0
        %v706 = vsel %vm537, %v677, -inf
        %707 = vmax.xlane.f32.xlu0 %v706
        %v708 = vpop.xlane.xlu0 %707
        %v709 = vsel %vm537, %v703, -inf
        %710 = vmax.xlane.f32.xlu0 %v709
        %v711 = vpop.xlane.xlu0 %710
        %v712 = vsub.f32 %v677, %v708
        %v713 = vsub.f32 %v703, %v711
        %v714 = vmul.f32 %v712, 1.442695
        %v715 = vpow.pop %v714
        %v716 = vmul.f32 %v713, 1.442695
        %v717 = vpow.pop %v716
        %v718 = vsel %vm537, %v715, 0.0
        %719 = vadd.xlane.f32.xlu0 %v718
        %v720 = vpop.xlane.xlu0 %719
        %v721 = vsel %vm537, %v717, 0.0
        %722 = vadd.xlane.f32.xlu0 %v721
        %v723 = vpop.xlane.xlu0 %722
        %v724 = vrcp.pop %v720
        %v725 = vrcp.pop %v723
        %v726 = vmul.f32 %v715, %v724
        %v727 = vmul.f32 %v717, %v725
        %v728 = vpack.c.bf16 %v726, %v726
        %v729 = vpack.c.bf16 %v727, %v727
        %730 = vrot.lane.b32.xlu0 %v607, 56
        %v731 = vpop.permute.xlu0 %730
        %v733 = vsel %vm537, %v728, 0
        %v736 = vsel %vm613, %v731, 0
        %738 = vmatpush.bf16.msra.mxu0 0
        %739 = vmatpush.bf16.msra.mxu0 0
        %740 = vmatpush.bf16.msra.mxu0 0
        %741 = vmatpush.bf16.msra.mxu0 0
        %742 = vmatpush.bf16.msra.mxu0 0
        %743 = vmatpush.bf16.msra.mxu0 0
        %744 = vmatpush.bf16.msra.mxu0 0
        %745 = vmatpush.bf16.msra.mxu0 %v736
        %746 = vmatmul.bf16.gmra.mxu0 %v733
        %v747 = vpop.f32.mrf.mxu0
        %v748 = vadd.f32 0.0, %v747
        %v749 = vpop.f32.mrf.mxu0
        %750 = vdwg.mxu0
        %751 = vrot.lane.b32.xlu0 %v632, 56
        %v752 = vpop.permute.xlu0 %751
        %v754 = vsel %vm537, %v729, 0
        %v757 = vsel %vm613, %v752, 0
        %759 = vmatpush.bf16.msra.mxu0 0
        %760 = vmatpush.bf16.msra.mxu0 0
        %761 = vmatpush.bf16.msra.mxu0 0
        %762 = vmatpush.bf16.msra.mxu0 0
        %763 = vmatpush.bf16.msra.mxu0 0
        %764 = vmatpush.bf16.msra.mxu0 0
        %765 = vmatpush.bf16.msra.mxu0 0
        %766 = vmatpush.bf16.msra.mxu0 %v757
        %767 = vmatmul.bf16.gmra.mxu0 %v754
        %v768 = vpop.f32.mrf.mxu0
        %v769 = vadd.f32 0.0, %v768
        %v770 = vpop.f32.mrf.mxu0
        %771 = vdwg.mxu0
        %772 = vrot.lane.b32.xlu0 %v656, 112
        %v773 = vpop.permute.xlu0 %772
        %774 = vrot.lane.b32.xlu0 %v534, 80
        %v775 = vpop.permute.xlu0 %774
        %v777 = vsel %vm537, %v773, 0
        %v780 = vsel %vm537, %v775, 0
        %782 = vmatpush.bf16.xpose.msra.mxu0 0
        %783 = vmatpush.bf16.xpose.msra.mxu0 0
        %784 = vmatpush.bf16.xpose.msra.mxu0 0
        %785 = vmatpush.bf16.xpose.msra.mxu0 0
        %786 = vmatpush.bf16.xpose.msra.mxu0 0
        %787 = vmatpush.bf16.xpose.msra.mxu0 0
        %788 = vmatpush.bf16.xpose.msra.mxu0 0
        %789 = vmatpush.bf16.xpose.msra.mxu0 %v780
        %790 = vmatmul.bf16.gmra.mxu0 %v777
        %v791 = vpop.f32.mrf.mxu0
        %v792 = vadd.f32 %v530, %v791
        %v793 = vpop.f32.mrf.mxu0
        %794 = vdwg.mxu0
        %795 = vrot.lane.b32.xlu0 %v682, 112
        %v796 = vpop.permute.xlu0 %795
        %797 = vrot.lane.b32.xlu0 %v559, 80
        %v798 = vpop.permute.xlu0 %797
        %v800 = vsel %vm537, %v796, 0
        %v803 = vsel %vm537, %v798, 0
        %805 = vmatpush.bf16.xpose.msra.mxu0 0
        %806 = vmatpush.bf16.xpose.msra.mxu0 0
        %807 = vmatpush.bf16.xpose.msra.mxu0 0
        %808 = vmatpush.bf16.xpose.msra.mxu0 0
        %809 = vmatpush.bf16.xpose.msra.mxu0 0
        %810 = vmatpush.bf16.xpose.msra.mxu0 0
        %811 = vmatpush.bf16.xpose.msra.mxu0 0
        %812 = vmatpush.bf16.xpose.msra.mxu0 %v803
        %813 = vmatmul.bf16.gmra.mxu0 %v800
        %v814 = vpop.f32.mrf.mxu0
        %v815 = vadd.f32 %v531, %v814
        %v816 = vpop.f32.mrf.mxu0
        %817 = vdwg.mxu0
        %v818 = vsel %vm537, %v792, -inf
        %819 = vmax.xlane.f32.xlu0 %v818
        %v820 = vpop.xlane.xlu0 %819
        %v821 = vsel %vm537, %v815, -inf
        %822 = vmax.xlane.f32.xlu0 %v821
        %v823 = vpop.xlane.xlu0 %822
        %v824 = vsub.f32 %v792, %v820
        %v825 = vsub.f32 %v815, %v823
        %v826 = vmul.f32 %v824, 1.442695
        %v827 = vpow.pop %v826
        %v828 = vmul.f32 %v825, 1.442695
        %v829 = vpow.pop %v828
        %v830 = vsel %vm537, %v827, 0.0
        %831 = vadd.xlane.f32.xlu0 %v830
        %v832 = vpop.xlane.xlu0 %831
        %v833 = vsel %vm537, %v829, 0.0
        %834 = vadd.xlane.f32.xlu0 %v833
        %v835 = vpop.xlane.xlu0 %834
        %v836 = vrcp.pop %v832
        %v837 = vrcp.pop %v835
        %v838 = vmul.f32 %v827, %v836
        %v839 = vmul.f32 %v829, %v837
        %v840 = vpack.c.bf16 %v838, %v838
        %v841 = vpack.c.bf16 %v839, %v839
        %842 = vrot.lane.b32.xlu0 %v607, 48
        %v843 = vpop.permute.xlu0 %842
        %v845 = vsel %vm537, %v840, 0
        %v848 = vsel %vm613, %v843, 0
        %850 = vmatpush.bf16.msra.mxu0 0
        %851 = vmatpush.bf16.msra.mxu0 0
        %852 = vmatpush.bf16.msra.mxu0 0
        %853 = vmatpush.bf16.msra.mxu0 0
        %854 = vmatpush.bf16.msra.mxu0 0
        %855 = vmatpush.bf16.msra.mxu0 0
        %856 = vmatpush.bf16.msra.mxu0 0
        %857 = vmatpush.bf16.msra.mxu0 %v848
        %858 = vmatmul.bf16.gmra.mxu0 %v845
        %v859 = vpop.f32.mrf.mxu0
        %v860 = vadd.f32 0.0, %v859
        %v861 = vpop.f32.mrf.mxu0
        %862 = vdwg.mxu0
        %863 = vrot.lane.b32.xlu0 %v632, 48
        %v864 = vpop.permute.xlu0 %863
        %v866 = vsel %vm537, %v841, 0
        %v869 = vsel %vm613, %v864, 0
        %871 = vmatpush.bf16.msra.mxu0 0
        %872 = vmatpush.bf16.msra.mxu0 0
        %873 = vmatpush.bf16.msra.mxu0 0
        %874 = vmatpush.bf16.msra.mxu0 0
        %875 = vmatpush.bf16.msra.mxu0 0
        %876 = vmatpush.bf16.msra.mxu0 0
        %877 = vmatpush.bf16.msra.mxu0 0
        %878 = vmatpush.bf16.msra.mxu0 %v869
        %879 = vmatmul.bf16.gmra.mxu0 %v866
        %v880 = vpop.f32.mrf.mxu0
        %v881 = vadd.f32 0.0, %v880
        %v882 = vpop.f32.mrf.mxu0
        %883 = vdwg.mxu0
        %884 = vrot.lane.b32.xlu0 %v656, 104
        %v885 = vpop.permute.xlu0 %884
        %886 = vrot.lane.b32.xlu0 %v534, 72
        %v887 = vpop.permute.xlu0 %886
        %v889 = vsel %vm537, %v885, 0
        %v892 = vsel %vm537, %v887, 0
        %894 = vmatpush.bf16.xpose.msra.mxu0 0
        %895 = vmatpush.bf16.xpose.msra.mxu0 0
        %896 = vmatpush.bf16.xpose.msra.mxu0 0
        %897 = vmatpush.bf16.xpose.msra.mxu0 0
        %898 = vmatpush.bf16.xpose.msra.mxu0 0
        %899 = vmatpush.bf16.xpose.msra.mxu0 0
        %900 = vmatpush.bf16.xpose.msra.mxu0 0
        %901 = vmatpush.bf16.xpose.msra.mxu0 %v892
        %902 = vmatmul.bf16.gmra.mxu0 %v889
        %v903 = vpop.f32.mrf.mxu0
        %v904 = vadd.f32 %v530, %v903
        %v905 = vpop.f32.mrf.mxu0
        %906 = vdwg.mxu0
        %907 = vrot.lane.b32.xlu0 %v682, 104
        %v908 = vpop.permute.xlu0 %907
        %909 = vrot.lane.b32.xlu0 %v559, 72
        %v910 = vpop.permute.xlu0 %909
        %v912 = vsel %vm537, %v908, 0
        %v915 = vsel %vm537, %v910, 0
        %917 = vmatpush.bf16.xpose.msra.mxu0 0
        %918 = vmatpush.bf16.xpose.msra.mxu0 0
        %919 = vmatpush.bf16.xpose.msra.mxu0 0
        %920 = vmatpush.bf16.xpose.msra.mxu0 0
        %921 = vmatpush.bf16.xpose.msra.mxu0 0
        %922 = vmatpush.bf16.xpose.msra.mxu0 0
        %923 = vmatpush.bf16.xpose.msra.mxu0 0
        %924 = vmatpush.bf16.xpose.msra.mxu0 %v915
        %925 = vmatmul.bf16.gmra.mxu0 %v912
        %v926 = vpop.f32.mrf.mxu0
        %v927 = vadd.f32 %v531, %v926
        %v928 = vpop.f32.mrf.mxu0
        %929 = vdwg.mxu0
        %v930 = vsel %vm537, %v904, -inf
        %931 = vmax.xlane.f32.xlu0 %v930
        %v932 = vpop.xlane.xlu0 %931
        %v933 = vsel %vm537, %v927, -inf
        %934 = vmax.xlane.f32.xlu0 %v933
        %v935 = vpop.xlane.xlu0 %934
        %v936 = vsub.f32 %v904, %v932
        %v937 = vsub.f32 %v927, %v935
        %v938 = vmul.f32 %v936, 1.442695
        %v939 = vpow.pop %v938
        %v940 = vmul.f32 %v937, 1.442695
        %v941 = vpow.pop %v940
        %v942 = vsel %vm537, %v939, 0.0
        %943 = vadd.xlane.f32.xlu0 %v942
        %v944 = vpop.xlane.xlu0 %943
        %v945 = vsel %vm537, %v941, 0.0
        %946 = vadd.xlane.f32.xlu0 %v945
        %v947 = vpop.xlane.xlu0 %946
        %v948 = vrcp.pop %v944
        %v949 = vrcp.pop %v947
        %v950 = vmul.f32 %v939, %v948
        %v951 = vmul.f32 %v941, %v949
        %v952 = vpack.c.bf16 %v950, %v950
        %v953 = vpack.c.bf16 %v951, %v951
        %954 = vrot.lane.b32.xlu0 %v607, 40
        %v955 = vpop.permute.xlu0 %954
        %v957 = vsel %vm537, %v952, 0
        %v960 = vsel %vm613, %v955, 0
        %962 = vmatpush.bf16.msra.mxu0 0
        %963 = vmatpush.bf16.msra.mxu0 0
        %964 = vmatpush.bf16.msra.mxu0 0
        %965 = vmatpush.bf16.msra.mxu0 0
        %966 = vmatpush.bf16.msra.mxu0 0
        %967 = vmatpush.bf16.msra.mxu0 0
        %968 = vmatpush.bf16.msra.mxu0 0
        %969 = vmatpush.bf16.msra.mxu0 %v960
        %970 = vmatmul.bf16.gmra.mxu0 %v957
        %v971 = vpop.f32.mrf.mxu0
        %v972 = vadd.f32 0.0, %v971
        %v973 = vpop.f32.mrf.mxu0
        %974 = vdwg.mxu0
        %975 = vrot.lane.b32.xlu0 %v632, 40
        %v976 = vpop.permute.xlu0 %975
        %v978 = vsel %vm537, %v953, 0
        %v981 = vsel %vm613, %v976, 0
        %983 = vmatpush.bf16.msra.mxu0 0
        %984 = vmatpush.bf16.msra.mxu0 0
        %985 = vmatpush.bf16.msra.mxu0 0
        %986 = vmatpush.bf16.msra.mxu0 0
        %987 = vmatpush.bf16.msra.mxu0 0
        %988 = vmatpush.bf16.msra.mxu0 0
        %989 = vmatpush.bf16.msra.mxu0 0
        %990 = vmatpush.bf16.msra.mxu0 %v981
        %991 = vmatmul.bf16.gmra.mxu0 %v978
        %v992 = vpop.f32.mrf.mxu0
        %v993 = vadd.f32 0.0, %v992
        %v994 = vpop.f32.mrf.mxu0
        %995 = vdwg.mxu0
        %998 = vrot.lane.b32.xlu0 %v748, 8
        %v999 = vpop.permute.xlu0 %998
        %1000 = vrot.lane.b32.xlu0 %v769, 8
        %v1001 = vpop.permute.xlu0 %1000
        %1006 = vrot.lane.b32.xlu0 %v860, 16
        %v1007 = vpop.permute.xlu0 %1006
        %1008 = vrot.lane.b32.xlu0 %v881, 16
        %v1009 = vpop.permute.xlu0 %1008
        %1014 = vrot.lane.b32.xlu0 %v972, 24
        %v1015 = vpop.permute.xlu0 %1014
        %1016 = vrot.lane.b32.xlu0 %v993, 24
        %v1017 = vpop.permute.xlu0 %1016
        %v1020 = vsel %vm537, %v627, %v999
        %v1021 = vsel %vm537, %v651, %v1001
        %vm1022 = vcmask 130048
        %v1023 = vsel %vm1022, %v1020, %v1007
        %v1024 = vsel %vm1022, %v1021, %v1009
        %vm1025 = vcmask 195584
        %v1026 = vsel %vm1025, %v1023, %v1015
        %v1027 = vsel %vm1025, %v1024, %v1017
        %v1028 = vpack.c.bf16 %v1027, %v1026
        %v1029 = vld [vmem:[%s432] sm:$0xf]
        %v1030 = vld [vmem:[%s432 + $0x4] sm:$0xf]
        %v1031 = vld [vmem:[%s432 + $0x8] sm:$0xf]
        %v1032 = vld [vmem:[%s432 + $0xc] sm:$0xf]
        %v1033 = vperm.slane %v464, 3
        %v1038 = vunpack.c.l.b16 %v1029
        %v1039 = vunpack.c.l.b16 %v1030
        %v1040 = vunpack.c.l.b16 %v1031
        %v1041 = vunpack.c.l.b16 %v1032
        %v1042 = vpack.c.b16 %v1039, %v1038
        %v1043 = vpack.c.b16 %v1041, %v1040
        %v1047 = vsel %vm483, %v1028, 0
        %1049 = vmatpush.bf16.msra.mxu0 0
        %1050 = vmatpush.bf16.msra.mxu0 0
        %1051 = vmatpush.bf16.msra.mxu0 0
        %1052 = vmatpush.bf16.msra.mxu0 0
        %1053 = vmatpush.bf16.msra.mxu0 0
        %1054 = vmatpush.bf16.msra.mxu0 0
        %1055 = vmatpush.bf16.msra.mxu0 %v1043
        %1056 = vmatpush.bf16.msra.mxu0 %v1042
        %1057 = vmatmul.bf16.gmra.mxu0 %v1047
        %v1058 = vpop.f32.mrf.mxu0
        %v1059 = vadd.f32 %v1033, %v1058
        %v1060 = vpop.f32.mrf.mxu0
        %v1061 = vadd.f32 %v1033, %v1060
        %1062 = vdwg.mxu0
        %v1063 = vadd.f32 %v462, %v1059
        %v1064 = vadd.f32 %v463, %v1061
        %v1065 = vsel %vm483, %v1063, 0.0
        %1066 = vadd.xlane.f32.xlu0 %v1065
        %v1067 = vpop.xlane.xlu0 %1066
        %v1068 = vsel %vm483, %v1064, 0.0
        %1069 = vadd.xlane.f32.xlu0 %v1068
        %v1070 = vpop.xlane.xlu0 %1069
        %v1071 = vrcp.pop 32.0
        %v1072 = vmul.f32 32.0, %v1071
        %v1073 = vsub.f32 1.0, %v1072
        %v1074 = vmul.f32 %v1071, %v1073
        %v1075 = vadd.f32 %v1071, %v1074
        %vm1076 = vweird.f32 %v1071
        %v1077 = vsel %vm1076, %v1071, %v1075
        %v1078 = vmul.f32 %v1067, %v1077
        %v1079 = vmul.f32 %v1070, %v1077
        %v1080 = vsub.f32 %v1063, %v1078
        %v1081 = vsub.f32 %v1064, %v1079
        %v1082 = vmul.f32 %v1080, %v1080
        %v1083 = vmul.f32 %v1081, %v1081
        %v1084 = vsel %vm483, %v1082, 0.0
        %1085 = vadd.xlane.f32.xlu0 %v1084
        %v1086 = vpop.xlane.xlu0 %1085
        %v1087 = vsel %vm483, %v1083, 0.0
        %1088 = vadd.xlane.f32.xlu0 %v1087
        %v1089 = vpop.xlane.xlu0 %1088
        %v1090 = vmul.f32 %v1086, %v1077
        %v1091 = vmul.f32 %v1089, %v1077
        %v1092 = vadd.f32 %v1090, 1e-05
        %v1093 = vadd.f32 %v1091, 1e-05
        %v1094 = vrsqrt.pop %v1092
        %v1095 = vmul.f32 %v1094, %v1092
        %v1096 = vmul.f32 %v1095, %v1094
        %v1097 = vmul.f32 0.5, %v1096
        %v1098 = vsub.f32 1.5, %v1097
        %v1099 = vmul.f32 %v1094, %v1098
        %vm1100 = vweird.f32 %v1092
        %vm1101 = vweird.f32 %v1094
        %vm1102 = vmor %vm1100, %vm1101
        %v1103 = vsel %vm1102, %v1094, %v1099
        %v1104 = vrsqrt.pop %v1093
        %v1105 = vmul.f32 %v1104, %v1093
        %v1106 = vmul.f32 %v1105, %v1104
        %v1107 = vmul.f32 0.5, %v1106
        %v1108 = vsub.f32 1.5, %v1107
        %v1109 = vmul.f32 %v1104, %v1108
        %vm1110 = vweird.f32 %v1093
        %vm1111 = vweird.f32 %v1104
        %vm1112 = vmor %vm1110, %vm1111
        %v1113 = vsel %vm1112, %v1104, %v1109
        %v1114 = vmul.f32 %v1080, %v1103
        %v1115 = vmul.f32 %v1081, %v1113
        %v1116 = vperm.slane %v464, 4
        %v1117 = vmul.f32 %v1114, %v1116
        %v1118 = vmul.f32 %v1115, %v1116
        %v1119 = vperm.slane %v464, 5
        %v1120 = vadd.f32 %v1117, %v1119
        %v1121 = vadd.f32 %v1118, %v1119
        %v1122 = vpack.c.bf16 %v1121, %v1120
        %v1123 = vld [vmem:[%s437] sm:$0xf]
        %v1124 = vld [vmem:[%s437 + $0x4] sm:$0xf]
        %v1125 = vld [vmem:[%s437 + $0x8] sm:$0xf]
        %v1126 = vld [vmem:[%s437 + $0xc] sm:$0xf]
        %v1127 = vld [vmem:[%s440] sm:$0x1]
        %v1129 = vperm.slane %v1127, 0
        %v1135 = vunpack.c.l.b16 %v1123
        %v1136 = vunpack.c.l.b16 %v1124
        %v1137 = vunpack.c.l.b16 %v1125
        %v1138 = vunpack.c.l.b16 %v1126
        %v1139 = vpack.c.b16 %v1136, %v1135
        %v1140 = vpack.c.b16 %v1138, %v1137
        %v1144 = vsel %vm483, %v1122, 0
        %1146 = vmatpush.bf16.msra.mxu0 0
        %1147 = vmatpush.bf16.msra.mxu0 0
        %1148 = vmatpush.bf16.msra.mxu0 0
        %1149 = vmatpush.bf16.msra.mxu0 0
        %1150 = vmatpush.bf16.msra.mxu0 0
        %1151 = vmatpush.bf16.msra.mxu0 0
        %1152 = vmatpush.bf16.msra.mxu0 %v1140
        %1153 = vmatpush.bf16.msra.mxu0 %v1139
        %1154 = vmatmul.bf16.gmra.mxu0 %v1144
        %v1155 = vpop.f32.mrf.mxu0
        %v1156 = vadd.f32 %v1129, %v1155
        %v1157 = vpop.f32.mrf.mxu0
        %v1158 = vadd.f32 %v1129, %v1157
        %1159 = vdwg.mxu0
        %v1160 = vmul.f32 %v1156, %v1156
        %v1161 = vmul.f32 %v1158, %v1158
        %v1162 = vmul.f32 %v1156, %v1160
        %v1163 = vmul.f32 %v1158, %v1161
        %v1164 = vmul.f32 %v1162, 0.044715
        %v1165 = vmul.f32 %v1163, 0.044715
        %v1166 = vadd.f32 %v1156, %v1164
        %v1167 = vadd.f32 %v1158, %v1165
        %v1168 = vmul.f32 %v1166, 0.7978846
        %v1169 = vmul.f32 %v1167, 0.7978846
        %v1170 = vtanh.pop %v1168
        %v1171 = vtanh.pop %v1169
        %v1172 = vadd.f32 %v1170, 1.0
        %v1173 = vadd.f32 %v1171, 1.0
        %v1174 = vmul.f32 %v1172, 0.5
        %v1175 = vmul.f32 %v1173, 0.5
        %v1176 = vmul.f32 %v1156, %v1174
        %v1177 = vmul.f32 %v1158, %v1175
        %v1178 = vpack.c.bf16 %v1177, %v1176
        %v1179 = vld [vmem:[%s445] sm:$0xf]
        %v1180 = vld [vmem:[%s445 + $0x4] sm:$0xf]
        %v1181 = vld [vmem:[%s445 + $0x8] sm:$0xf]
        %v1182 = vld [vmem:[%s445 + $0xc] sm:$0xf]
        %v1183 = vld [vmem:[%s445 + $0x10] sm:$0xf]
        %v1184 = vld [vmem:[%s445 + $0x14] sm:$0xf]
        %v1185 = vld [vmem:[%s445 + $0x18] sm:$0xf]
        %v1186 = vld [vmem:[%s445 + $0x1c] sm:$0xf]
        %v1187 = vperm.slane %v464, 6
        %v1196 = vunpack.c.l.b16 %v1179
        %v1197 = vunpack.c.l.b16 %v1180
        %v1198 = vunpack.c.l.b16 %v1181
        %v1199 = vunpack.c.l.b16 %v1182
        %v1200 = vunpack.c.l.b16 %v1183
        %v1201 = vunpack.c.l.b16 %v1184
        %v1202 = vunpack.c.l.b16 %v1185
        %v1203 = vunpack.c.l.b16 %v1186
        %v1204 = vpack.c.b16 %v1197, %v1196
        %v1205 = vpack.c.b16 %v1199, %v1198
        %v1206 = vpack.c.b16 %v1201, %v1200
        %v1207 = vpack.c.b16 %v1203, %v1202
        %vm1212 = vcmask 523264
        %v1214 = vsel %vm1212, %v1178, 0
        %1216 = vmatpush.bf16.msra.mxu0 0
        %1217 = vmatpush.bf16.msra.mxu0 0
        %1218 = vmatpush.bf16.msra.mxu0 0
        %1219 = vmatpush.bf16.msra.mxu0 0
        %1220 = vmatpush.bf16.msra.mxu0 %v1207
        %1221 = vmatpush.bf16.msra.mxu0 %v1206
        %1222 = vmatpush.bf16.msra.mxu0 %v1205
        %1223 = vmatpush.bf16.msra.mxu0 %v1204
        %1224 = vmatmul.bf16.gmra.mxu0 %v1214
        %v1225 = vpop.f32.mrf.mxu0
        %v1226 = vadd.f32 %v1187, %v1225
        %v1227 = vpop.f32.mrf.mxu0
        %v1228 = vadd.f32 %v1187, %v1227
        %1229 = vdwg.mxu0
        %v1230 = vadd.f32 %v1120, %v1226
        %v1231 = vadd.f32 %v1121, %v1228
        %v1232 = vsel %vm483, %v1230, 0.0
        %1233 = vadd.xlane.f32.xlu0 %v1232
        %v1234 = vpop.xlane.xlu0 %1233
        %v1235 = vsel %vm483, %v1231, 0.0
        %1236 = vadd.xlane.f32.xlu0 %v1235
        %v1237 = vpop.xlane.xlu0 %1236
        %v1238 = vmul.f32 %v1234, %v1077
        %v1239 = vmul.f32 %v1237, %v1077
        %v1240 = vsub.f32 %v1230, %v1238
        %v1241 = vsub.f32 %v1231, %v1239
        %v1242 = vmul.f32 %v1240, %v1240
        %v1243 = vmul.f32 %v1241, %v1241
        %v1244 = vsel %vm483, %v1242, 0.0
        %1245 = vadd.xlane.f32.xlu0 %v1244
        %v1246 = vpop.xlane.xlu0 %1245
        %v1247 = vsel %vm483, %v1243, 0.0
        %1248 = vadd.xlane.f32.xlu0 %v1247
        %v1249 = vpop.xlane.xlu0 %1248
        %v1250 = vmul.f32 %v1246, %v1077
        %v1251 = vmul.f32 %v1249, %v1077
        %v1252 = vadd.f32 %v1250, 1e-05
        %v1253 = vadd.f32 %v1251, 1e-05
        %v1254 = vrsqrt.pop %v1252
        %v1255 = vmul.f32 %v1254, %v1252
        %v1256 = vmul.f32 %v1255, %v1254
        %v1257 = vmul.f32 0.5, %v1256
        %v1258 = vsub.f32 1.5, %v1257
        %v1259 = vmul.f32 %v1254, %v1258
        %vm1260 = vweird.f32 %v1252
        %vm1261 = vweird.f32 %v1254
        %vm1262 = vmor %vm1260, %vm1261
        %v1263 = vsel %vm1262, %v1254, %v1259
        %v1264 = vrsqrt.pop %v1253
        %v1265 = vmul.f32 %v1264, %v1253
        %v1266 = vmul.f32 %v1265, %v1264
        %v1267 = vmul.f32 0.5, %v1266
        %v1268 = vsub.f32 1.5, %v1267
        %v1269 = vmul.f32 %v1264, %v1268
        %vm1270 = vweird.f32 %v1253
        %vm1271 = vweird.f32 %v1264
        %vm1272 = vmor %vm1270, %vm1271
        %v1273 = vsel %vm1272, %v1264, %v1269
        %v1274 = vmul.f32 %v1240, %v1263
        %v1275 = vmul.f32 %v1241, %v1273
        %v1276 = vperm.slane %v464, 7
        %v1277 = vmul.f32 %v1274, %v1276
        %v1278 = vmul.f32 %v1275, %v1276
        %v1279 = vperm.slane %v465, 0
        %v1280 = vadd.f32 %v1277, %v1279
        %v1281 = vadd.f32 %v1278, %v1279
        %1282 = vst.msk [vmem:[#allocation5] sm:$0xff] %vm483, %v1280
        %1283 = vst.msk [vmem:[#allocation5 + $0x8] sm:$0xff] %vm483, %v1281
        // Predicated region
        $region61: #{tpu_custom_call.1} parent=51 // pred_check
          %p1284 = pneg %p259
        $region62: #{tpu_custom_call.1} parent=51 // pred_check_branch
          %1286 = sbr.rel (%p1284) target = $region64
        $region63: #{tpu_custom_call.1} parent=51 // pred_region
          %s1287 = smul.u32 2, %s25
          %1289 = vsyncadd [#allocation4], 0
          %s1290 = smul.addr %s1287, 8
          %s1291 = scalar_lea.hbm %s8, %s1290
          %s1292 = sshll.u32 [#allocation5], 4
          %s1293 = int_to_ptr.vmem [resolvable:$true] %s1292
          %s1294 = sshll.u32 %s1291, 4
          %s1295 = int_to_ptr.hbm [resolvable:$true] %s1294
          %1300 = dma.vmem_to_hbm [thread:$0]  %s1293, 256, %s1295, [#allocation4], 128, 128, 8
        $region64: #{tpu_custom_call.1} parent=51 // pred_fallthru
          _
        // Predicated region
        $region65: #{tpu_custom_call.1} parent=51 // pred_check
          %p1301 = pneg %p259
        $region66: #{tpu_custom_call.1} parent=51 // pred_check_branch
          %1303 = sbr.rel (%p1301) target = $region68
        $region67: #{tpu_custom_call.1} parent=51 // pred_region
          %1305 = dma.done [#allocation4], 256
        $region68: #{tpu_custom_call.1} parent=51 // pred_fallthru
          _
      $region52: #{tpu_custom_call.1} parent=5 // pred_fallthru
        _
      %p1306 = scmp.le.s32.totalorder 2, %s16
      // Predicated region
      $region69: #{tpu_custom_call.1} parent=5 // pred_check
        %p1307 = pneg %p1306
      $region70: #{tpu_custom_call.1} parent=5 // pred_check_branch
        %1309 = sbr.rel (%p1307) target = $region72
      $region71: #{tpu_custom_call.1} parent=5 // pred_region
        %s1310 = ssub.s32 %s16, 2
      $region72: #{tpu_custom_call.1} parent=5 // pred_fallthru
        _
    $region6: #{tpu_custom_call.1} parent=1 // loop_footer
      %s20 = sadd.s32 1, %s16
    $region7: #{tpu_custom_call.1} parent=1 // loop_footer_branch
      %15 = sbr.rel target = $region3
    $region8: #{tpu_custom_call.1} parent=1 // loop_exit
      _
    %1311 = vsyncpa [#allocation3], 1
    %s1312 = scalar_lea.sflag [#allocation3], 1
    %1313 = vsyncpa %s1312, 1
    %1314 = vsyncpa [#allocation4], 1
    %s1315 = scalar_lea.sflag [#allocation4], 1
    %1316 = vsyncpa %s1315, 1

</llo_original>
